<compile_context>
chip_gen: v7x
topology: tpu7x:2x2x1
jax: 0.10.0
libtpu: 0.0.40
codegen_flags: <defaults>
</compile_context>

<pallas_src>
import functools
import math

import numpy as np
import jax
import jax.numpy as jnp
from jax.experimental import pallas as pl
from jax.experimental.pallas import tpu as pltpu

PDM_FACTOR = 10
TH = 1.0
CHUNK = 128            # cumsum chunk width (lanes)
LT = 128               # input frames per grid tile -> output tile = LT*PDM_FACTOR lanes


# ---------------------------------------------------------------------------
# Host-side constants (deterministic; replicates torchaudio sinc_interp_hann
# after gcd reduction: orig=1, new=pdm_factor).  Pure glue, no data loading.
# ---------------------------------------------------------------------------
def _sinc_resample_kernel(pdm_factor, lowpass_filter_width=6, rolloff=0.99):
    orig, new = 1, pdm_factor
    base_freq = min(orig, new) * rolloff
    width = int(math.ceil(lowpass_filter_width * orig / base_freq))
    idx = np.arange(-width, width + orig, dtype=np.float64) / orig
    t = np.arange(0, -new, -1, dtype=np.float64)[:, None] / new + idx[None, :]
    t = np.clip(t * base_freq, -lowpass_filter_width, lowpass_filter_width)
    window = np.cos(t * math.pi / lowpass_filter_width / 2.0) ** 2
    t = t * math.pi
    scale = base_freq / orig
    sinc = np.where(t == 0.0, 1.0, np.sin(t) / np.where(t == 0.0, 1.0, t))
    return (sinc * window * scale).astype(np.float32), width   # (new, 2*width+1)


def build_banded_resample_tile(lt, pdm_factor):
    """Shift-invariant banded resample operator for ONE time tile.

    up_tile[b, i*new + p] = sum_k kern[p, k] * scaled_window[b, i + k]
    where scaled_window starts `width` samples before the tile's first frame.
    Returns R_loc of shape (lt + CHUNK, lt * new) and the filter half-width.
    """
    if pdm_factor == 1:
        kern, width = np.ones((1, 1), dtype=np.float32), 0
    else:
        kern, width = _sinc_resample_kernel(pdm_factor)
    new, kw = kern.shape
    assert kw - 1 <= CHUNK, "filter support must fit the lane-aligned window pad"
    R = np.zeros((lt + CHUNK, lt * new), dtype=np.float32)
    for i in range(lt):
        for p in range(new):
            for k in range(kw):
                R[i + k, i * new + p] = kern[p, k]
    return R, width


# ---------------------------------------------------------------------------
# Pallas kernel: one upsampled-time tile per grid step, carried cumsum.
# ---------------------------------------------------------------------------
def _pdm_kernel(x_ref, r_ref, tri_ref, o_ref, carry_ref, *, lt, tt, th):
    t = pl.program_id(0)

    @pl.when(t == 0)
    def _init():
        carry_ref[...] = jnp.zeros_like(carry_ref)

    # --- banded polyphase sinc resample for this tile: one aligned MXU matmul
    start = pl.multiple_of(t * lt, CHUNK)
    win = x_ref[:, pl.ds(start, lt + CHUNK)]        # overlapping, lane-aligned window
    scaled = win * 0.5 + 0.5                        # waveform/2 + 0.5 ; pad(-1) -> exactly 0
    r = r_ref[...]
    up = jnp.dot(scaled, r, preferred_element_type=jnp.float32)   # (B, tt)

    # --- blocked cumsum: 128-lane chunks x (128,128) triangular constant + carry
    tri = tri_ref[...]                              # hoisted constant load
    lane = jax.lax.broadcasted_iota(jnp.int32, (1, CHUNK), 1)
    carry = carry_ref[...]                          # (B, 1) running total
    inv_th = 1.0 / th
    nc = tt // CHUNK
    for j in range(nc):                             # static, small unrolled loop
        seg = up[:, j * CHUNK:(j + 1) * CHUNK]      # (B, 128)
        cs = jnp.dot(seg, tri, preferred_element_type=jnp.float32) + carry
        prev = cs - seg                             # shifted cumsum (= csum[t-1]) on the VPU
        if th == 1.0:
            fdiv, fprev = jnp.floor(cs), jnp.floor(prev)
        else:
            fdiv, fprev = jnp.floor(cs * inv_th), jnp.floor(prev * inv_th)
        if j == 0:
            # torch: F.pad(div[:, :-1], (1, 0), value=-1) -> first global sample
            fprev = jnp.where((lane == 0) & (t == 0), -1.0, fprev)
        o_ref[:, j * CHUNK:(j + 1) * CHUNK] = (fdiv > fprev).astype(o_ref.dtype)
        # exact extraction of cs[:, -1] as the new carry (masked lane-reduce)
        carry = jnp.sum(jnp.where(lane == CHUNK - 1, cs, 0.0), axis=1, keepdims=True)
    carry_ref[...] = carry


def pdm_encode(waveform, r_loc, tri, *, pdm_factor=PDM_FACTOR, width=7, th=TH):
    B, L = waveform.shape
    lt = r_loc.shape[0] - CHUNK
    tt = lt * pdm_factor
    assert r_loc.shape[1] == tt and lt % CHUNK == 0 and 2 * width <= CHUNK
    n_tiles = (L + lt - 1) // lt
    l_pad = n_tiles * lt
    # Pad with -1 so the in-kernel scale (x/2 + 0.5) maps padding to exactly 0,
    # matching torchaudio's zero padding of the *scaled* waveform.
    x_pad = jnp.pad(waveform.astype(jnp.float32),
                    ((0, 0), (width, l_pad + CHUNK - width - L)),
                    constant_values=-1.0)

    flops = (n_tiles * 2 * B * ((lt + CHUNK) * tt + (tt // CHUNK) * CHUNK * CHUNK)
             + 8 * B * l_pad * pdm_factor)
    bytes_accessed = 4 * (B * (l_pad + CHUNK) + (lt + CHUNK) * tt
                          + CHUNK * CHUNK + B * l_pad * pdm_factor)

    out = pl.pallas_call(
        functools.partial(_pdm_kernel, lt=lt, tt=tt, th=th),
        out_shape=jax.ShapeDtypeStruct((B, l_pad * pdm_factor), jnp.float32),
        grid_spec=pltpu.PrefetchScalarGridSpec(
            num_scalar_prefetch=0,
            grid=(n_tiles,),
            in_specs=[
                pl.BlockSpec((B, l_pad + CHUNK), lambda t: (0, 0)),   # waveform (resident)
                pl.BlockSpec((lt + CHUNK, tt), lambda t: (0, 0)),     # banded FIR (resident)
                pl.BlockSpec((CHUNK, CHUNK), lambda t: (0, 0)),       # cumsum triangle (resident)
            ],
            out_specs=pl.BlockSpec((B, tt), lambda t: (0, t)),        # lane-dense output tile
            scratch_shapes=[pltpu.VMEM((B, 1), jnp.float32)],         # cumsum carry
        ),
        compiler_params=pltpu.CompilerParams(
            dimension_semantics=("arbitrary",),     # sequential: carry over time tiles
            vmem_limit_bytes=32 * 1024 * 1024),
        cost_estimate=pl.CostEstimate(flops=flops, transcendentals=0,
                                      bytes_accessed=bytes_accessed),
    )(x_pad, r_loc, tri)
    return out[:, :pdm_factor * L]


if __name__ == "__main__":
    B, L = 2, 16                        # small test; upsampled length = 10 * 16 = 160
    key = jax.random.PRNGKey(0)
    waveform = jax.random.uniform(key, (B, L), minval=-1.0, maxval=1.0,
                                  dtype=jnp.float32)

    r_loc_np, width = build_banded_resample_tile(LT, PDM_FACTOR)
    tri_np = np.triu(np.ones((CHUNK, CHUNK), dtype=np.float32))   # tri[m,k]=1 for m<=k
    r_loc = jnp.asarray(r_loc_np)
    tri = jnp.asarray(tri_np)

    encode = jax.jit(lambda w: pdm_encode(w, r_loc, tri, pdm_factor=PDM_FACTOR,
                                          width=width, th=TH))
    spikes = jax.block_until_ready(encode(waveform))

    # ---- host-side float64 reference mirroring the torch forward ----
    kern, _ = _sinc_resample_kernel(PDM_FACTOR)
    kern64 = kern.astype(np.float64)
    kw = kern.shape[1]
    x = np.asarray(waveform, dtype=np.float64)
    scaled = x / 2.0 + 0.5
    pad = np.pad(scaled, ((0, 0), (width, width)))
    up = np.zeros((B, PDM_FACTOR * L), dtype=np.float64)
    for i in range(L):
        for p in range(PDM_FACTOR):
            up[:, i * PDM_FACTOR + p] = pad[:, i:i + kw] @ kern64[p]
    csum = np.cumsum(up, axis=1)
    fdiv = np.floor(csum / TH)
    prev = np.concatenate([np.full((B, 1), -1.0), fdiv[:, :-1]], axis=1)
    ref = (fdiv - prev > 0).astype(np.float32)

    got = np.asarray(spikes)
    assert got.shape == (B, PDM_FACTOR * L), got.shape
    assert got.dtype == np.float32
    assert np.all((got == 0.0) | (got == 1.0)), "spikes must be binary"
    # mask positions where the f32 floor decision is numerically ambiguous
    csum_prev = np.concatenate([np.zeros((B, 1)), csum[:, :-1]], axis=1)
    amb = (np.abs(csum / TH - np.round(csum / TH)) < 5e-4) | \
          (np.abs(csum_prev / TH - np.round(csum_prev / TH)) < 5e-4)
    bad = (got != ref) & ~amb
    assert not bad.any(), f"{int(bad.sum())} spike mismatches vs f64 reference"
    print("KERNEL_OK")
</pallas_src>

<mosaic_0001>
module attributes {stable_mosaic.version = 11 : i64} {
  func.func @_pdm_kernel(%arg0: i32, %arg1: memref<2x256xf32, #tpu.memory_space<vmem>>, %arg2: memref<256x1280xf32, #tpu.memory_space<vmem>>, %arg3: memref<128x128xf32, #tpu.memory_space<vmem>>, %arg4: memref<2x1280xf32, #tpu.memory_space<vmem>>, %arg5: memref<2x1xf32, #tpu.memory_space<vmem>>) attributes {dimension_semantics = [#tpu.dimension_semantics<arbitrary>], iteration_bounds = array<i64: 1>, scalar_prefetch = 0 : i64, scratch_operands = 1 : i64, tpu.core_type = #tpu.core_type<tc>, window_params = [{pipeline_mode = #tpu.pipeline_mode<synchronous>, transform_indices = @transform_0, window_bounds = array<i64: 2, 256>}, {pipeline_mode = #tpu.pipeline_mode<synchronous>, transform_indices = @transform_1, window_bounds = array<i64: 256, 1280>}, {pipeline_mode = #tpu.pipeline_mode<synchronous>, transform_indices = @transform_2, window_bounds = array<i64: 128, 128>}, {transform_indices = @transform_3, window_bounds = array<i64: 2, 1280>}]} {
    %c0_i32 = arith.constant 0 : i32
    %0 = arith.cmpi eq, %arg0, %c0_i32 : i32
    %1 = arith.extui %0 : i1 to i32
    %c0_i32_0 = arith.constant 0 : i32
    %2 = arith.cmpi ne, %1, %c0_i32_0 : i32
    scf.if %2 {
      %cst_64 = arith.constant 0.000000e+00 : f32
      %216 = vector.broadcast %cst_64 : f32 to vector<2x1xf32>
      %c0_65 = arith.constant 0 : index
      %c0_66 = arith.constant 0 : index
      %217 = vector.load %arg5[%c0_65, %c0_66] : memref<2x1xf32, #tpu.memory_space<vmem>>, vector<2x1xf32>
      tpu.vector_store %arg5[%c0_65, %c0_66], %216 {strides = array<i32>} : memref<2x1xf32, #tpu.memory_space<vmem>>, vector<2x1xf32>,
    } else {
    }
    %c128_i32 = arith.constant 128 : i32
    %3 = arith.muli %arg0, %c128_i32 : i32
    %4 = tpu.assume_multiple %3, 128 : i32
    %c0 = arith.constant 0 : index
    %5 = arith.index_cast %4 : i32 to index
    %6 = vector.load %arg1[%c0, %5] : memref<2x256xf32, #tpu.memory_space<vmem>>, vector<2x256xf32>
    %cst = arith.constant 5.000000e-01 : f32
    %7 = vector.broadcast %cst : f32 to vector<2x256xf32>
    %8 = arith.mulf %6, %7 : vector<2x256xf32>
    %cst_1 = arith.constant 5.000000e-01 : f32
    %9 = vector.broadcast %cst_1 : f32 to vector<2x256xf32>
    %10 = arith.addf %8, %9 : vector<2x256xf32>
    %c0_2 = arith.constant 0 : index
    %c0_3 = arith.constant 0 : index
    %11 = vector.load %arg2[%c0_2, %c0_3] : memref<256x1280xf32, #tpu.memory_space<vmem>>, vector<256x1280xf32>
    %cst_4 = arith.constant dense<0.000000e+00> : vector<2x1280xf32>
    %12 = tpu.matmul %10, %11, %cst_4 {dimension_numbers = #tpu.dot_dimension_numbers<[1], [0], [0], [1], [0, 0, 1, 1], [], []>} : vector<2x256xf32>, vector<256x1280xf32>, vector<2x1280xf32> -> vector<2x1280xf32>
    %c0_5 = arith.constant 0 : index
    %c0_6 = arith.constant 0 : index
    %13 = vector.load %arg3[%c0_5, %c0_6] : memref<128x128xf32, #tpu.memory_space<vmem>>, vector<128x128xf32>
    %14 = tpu.iota {dimensions = array<i32: 1>} : vector<1x128xi32>
    %c0_7 = arith.constant 0 : index
    %c0_8 = arith.constant 0 : index
    %15 = vector.load %arg5[%c0_7, %c0_8] : memref<2x1xf32, #tpu.memory_space<vmem>>, vector<2x1xf32>
    %16 = vector.extract_strided_slice %12 {offsets = [0, 0], sizes = [2, 128], strides = [1, 1]} : vector<2x1280xf32> to vector<2x128xf32>
    %cst_9 = arith.constant dense<0.000000e+00> : vector<2x128xf32>
    %17 = tpu.matmul %16, %13, %cst_9 {dimension_numbers = #tpu.dot_dimension_numbers<[1], [0], [0], [1], [0, 0, 1, 1], [], []>} : vector<2x128xf32>, vector<128x128xf32>, vector<2x128xf32> -> vector<2x128xf32>
    %18 = vector.broadcast %15 : vector<2x1xf32> to vector<2x128xf32>
    %19 = arith.addf %17, %18 : vector<2x128xf32>
    %20 = arith.subf %19, %16 : vector<2x128xf32>
    %21 = math.floor %19 : vector<2x128xf32>
    %22 = math.floor %20 : vector<2x128xf32>
    %c0_i32_10 = arith.constant 0 : i32
    %23 = vector.broadcast %c0_i32_10 : i32 to vector<1x128xi32>
    %24 = arith.cmpi eq, %14, %23 : vector<1x128xi32>
    %c0_i32_11 = arith.constant 0 : i32
    %25 = arith.cmpi eq, %arg0, %c0_i32_11 : i32
    %26 = vector.broadcast %25 : i1 to vector<1x128xi1>
    %27 = arith.andi %24, %26 : vector<1x128xi1>
    %cst_12 = arith.constant -1.000000e+00 : f32
    %28 = vector.shape_cast %27 : vector<1x128xi1> to vector<1x128xi1>
    %29 = vector.broadcast %28 : vector<1x128xi1> to vector<2x128xi1>
    %30 = vector.broadcast %cst_12 : f32 to vector<2x128xf32>
    %31 = arith.select %29, %30, %22 : vector<2x128xi1>, vector<2x128xf32>
    %32 = arith.cmpf ogt, %21, %31 : vector<2x128xf32>
    %33 = arith.extui %32 : vector<2x128xi1> to vector<2x128xi32>
    %34 = arith.sitofp %33 : vector<2x128xi32> to vector<2x128xf32>
    %c0_13 = arith.constant 0 : index
    %c0_14 = arith.constant 0 : index
    %35 = vector.load %arg4[%c0_13, %c0_14] : memref<2x1280xf32, #tpu.memory_space<vmem>>, vector<2x128xf32>
    tpu.vector_store %arg4[%c0_13, %c0_14], %34 {strides = array<i32>} : memref<2x1280xf32, #tpu.memory_space<vmem>>, vector<2x128xf32>,
    %c127_i32 = arith.constant 127 : i32
    %36 = vector.broadcast %c127_i32 : i32 to vector<1x128xi32>
    %37 = arith.cmpi eq, %14, %36 : vector<1x128xi32>
    %cst_15 = arith.constant 0.000000e+00 : f32
    %38 = vector.shape_cast %37 : vector<1x128xi1> to vector<1x128xi1>
    %39 = vector.broadcast %38 : vector<1x128xi1> to vector<2x128xi1>
    %40 = vector.broadcast %cst_15 : f32 to vector<2x128xf32>
    %41 = arith.select %39, %19, %40 : vector<2x128xi1>, vector<2x128xf32>
    %cst_16 = arith.constant dense<0.000000e+00> : vector<2xf32>
    %42 = vector.multi_reduction <add>, %41, %cst_16 [1] : vector<2x128xf32> to vector<2xf32>
    %43 = vector.shape_cast %42 : vector<2xf32> to vector<2x1xf32>
    %44 = vector.extract_strided_slice %12 {offsets = [0, 128], sizes = [2, 128], strides = [1, 1]} : vector<2x1280xf32> to vector<2x128xf32>
    %cst_17 = arith.constant dense<0.000000e+00> : vector<2x128xf32>
    %45 = tpu.matmul %44, %13, %cst_17 {dimension_numbers = #tpu.dot_dimension_numbers<[1], [0], [0], [1], [0, 0, 1, 1], [], []>} : vector<2x128xf32>, vector<128x128xf32>, vector<2x128xf32> -> vector<2x128xf32>
    %46 = vector.broadcast %43 : vector<2x1xf32> to vector<2x128xf32>
    %47 = arith.addf %45, %46 : vector<2x128xf32>
    %48 = arith.subf %47, %44 : vector<2x128xf32>
    %49 = math.floor %47 : vector<2x128xf32>
    %50 = math.floor %48 : vector<2x128xf32>
    %51 = arith.cmpf ogt, %49, %50 : vector<2x128xf32>
    %52 = arith.extui %51 : vector<2x128xi1> to vector<2x128xi32>
    %53 = arith.sitofp %52 : vector<2x128xi32> to vector<2x128xf32>
    %c0_18 = arith.constant 0 : index
    %c128 = arith.constant 128 : index
    %54 = vector.load %arg4[%c0_18, %c128] : memref<2x1280xf32, #tpu.memory_space<vmem>>, vector<2x128xf32>
    tpu.vector_store %arg4[%c0_18, %c128], %53 {strides = array<i32>} : memref<2x1280xf32, #tpu.memory_space<vmem>>, vector<2x128xf32>,
    %c127_i32_19 = arith.constant 127 : i32
    %55 = vector.broadcast %c127_i32_19 : i32 to vector<1x128xi32>
    %56 = arith.cmpi eq, %14, %55 : vector<1x128xi32>
    %cst_20 = arith.constant 0.000000e+00 : f32
    %57 = vector.shape_cast %56 : vector<1x128xi1> to vector<1x128xi1>
    %58 = vector.broadcast %57 : vector<1x128xi1> to vector<2x128xi1>
    %59 = vector.broadcast %cst_20 : f32 to vector<2x128xf32>
    %60 = arith.select %58, %47, %59 : vector<2x128xi1>, vector<2x128xf32>
    %cst_21 = arith.constant dense<0.000000e+00> : vector<2xf32>
    %61 = vector.multi_reduction <add>, %60, %cst_21 [1] : vector<2x128xf32> to vector<2xf32>
    %62 = vector.shape_cast %61 : vector<2xf32> to vector<2x1xf32>
    %63 = vector.extract_strided_slice %12 {offsets = [0, 256], sizes = [2, 128], strides = [1, 1]} : vector<2x1280xf32> to vector<2x128xf32>
    %cst_22 = arith.constant dense<0.000000e+00> : vector<2x128xf32>
    %64 = tpu.matmul %63, %13, %cst_22 {dimension_numbers = #tpu.dot_dimension_numbers<[1], [0], [0], [1], [0, 0, 1, 1], [], []>} : vector<2x128xf32>, vector<128x128xf32>, vector<2x128xf32> -> vector<2x128xf32>
    %65 = vector.broadcast %62 : vector<2x1xf32> to vector<2x128xf32>
    %66 = arith.addf %64, %65 : vector<2x128xf32>
    %67 = arith.subf %66, %63 : vector<2x128xf32>
    %68 = math.floor %66 : vector<2x128xf32>
    %69 = math.floor %67 : vector<2x128xf32>
    %70 = arith.cmpf ogt, %68, %69 : vector<2x128xf32>
    %71 = arith.extui %70 : vector<2x128xi1> to vector<2x128xi32>
    %72 = arith.sitofp %71 : vector<2x128xi32> to vector<2x128xf32>
    %c0_23 = arith.constant 0 : index
    %c256 = arith.constant 256 : index
    %73 = vector.load %arg4[%c0_23, %c256] : memref<2x1280xf32, #tpu.memory_space<vmem>>, vector<2x128xf32>
    tpu.vector_store %arg4[%c0_23, %c256], %72 {strides = array<i32>} : memref<2x1280xf32, #tpu.memory_space<vmem>>, vector<2x128xf32>,
    %c127_i32_24 = arith.constant 127 : i32
    %74 = vector.broadcast %c127_i32_24 : i32 to vector<1x128xi32>
    %75 = arith.cmpi eq, %14, %74 : vector<1x128xi32>
    %cst_25 = arith.constant 0.000000e+00 : f32
    %76 = vector.shape_cast %75 : vector<1x128xi1> to vector<1x128xi1>
    %77 = vector.broadcast %76 : vector<1x128xi1> to vector<2x128xi1>
    %78 = vector.broadcast %cst_25 : f32 to vector<2x128xf32>
    %79 = arith.select %77, %66, %78 : vector<2x128xi1>, vector<2x128xf32>
    %cst_26 = arith.constant dense<0.000000e+00> : vector<2xf32>
    %80 = vector.multi_reduction <add>, %79, %cst_26 [1] : vector<2x128xf32> to vector<2xf32>
    %81 = vector.shape_cast %80 : vector<2xf32> to vector<2x1xf32>
    %82 = vector.extract_strided_slice %12 {offsets = [0, 384], sizes = [2, 128], strides = [1, 1]} : vector<2x1280xf32> to vector<2x128xf32>
    %cst_27 = arith.constant dense<0.000000e+00> : vector<2x128xf32>
    %83 = tpu.matmul %82, %13, %cst_27 {dimension_numbers = #tpu.dot_dimension_numbers<[1], [0], [0], [1], [0, 0, 1, 1], [], []>} : vector<2x128xf32>, vector<128x128xf32>, vector<2x128xf32> -> vector<2x128xf32>
    %84 = vector.broadcast %81 : vector<2x1xf32> to vector<2x128xf32>
    %85 = arith.addf %83, %84 : vector<2x128xf32>
    %86 = arith.subf %85, %82 : vector<2x128xf32>
    %87 = math.floor %85 : vector<2x128xf32>
    %88 = math.floor %86 : vector<2x128xf32>
    %89 = arith.cmpf ogt, %87, %88 : vector<2x128xf32>
    %90 = arith.extui %89 : vector<2x128xi1> to vector<2x128xi32>
    %91 = arith.sitofp %90 : vector<2x128xi32> to vector<2x128xf32>
    %c0_28 = arith.constant 0 : index
    %c384 = arith.constant 384 : index
    %92 = vector.load %arg4[%c0_28, %c384] : memref<2x1280xf32, #tpu.memory_space<vmem>>, vector<2x128xf32>
    tpu.vector_store %arg4[%c0_28, %c384], %91 {strides = array<i32>} : memref<2x1280xf32, #tpu.memory_space<vmem>>, vector<2x128xf32>,
    %c127_i32_29 = arith.constant 127 : i32
    %93 = vector.broadcast %c127_i32_29 : i32 to vector<1x128xi32>
    %94 = arith.cmpi eq, %14, %93 : vector<1x128xi32>
    %cst_30 = arith.constant 0.000000e+00 : f32
    %95 = vector.shape_cast %94 : vector<1x128xi1> to vector<1x128xi1>
    %96 = vector.broadcast %95 : vector<1x128xi1> to vector<2x128xi1>
    %97 = vector.broadcast %cst_30 : f32 to vector<2x128xf32>
    %98 = arith.select %96, %85, %97 : vector<2x128xi1>, vector<2x128xf32>
    %cst_31 = arith.constant dense<0.000000e+00> : vector<2xf32>
    %99 = vector.multi_reduction <add>, %98, %cst_31 [1] : vector<2x128xf32> to vector<2xf32>
    %100 = vector.shape_cast %99 : vector<2xf32> to vector<2x1xf32>
    %101 = vector.extract_strided_slice %12 {offsets = [0, 512], sizes = [2, 128], strides = [1, 1]} : vector<2x1280xf32> to vector<2x128xf32>
    %cst_32 = arith.constant dense<0.000000e+00> : vector<2x128xf32>
    %102 = tpu.matmul %101, %13, %cst_32 {dimension_numbers = #tpu.dot_dimension_numbers<[1], [0], [0], [1], [0, 0, 1, 1], [], []>} : vector<2x128xf32>, vector<128x128xf32>, vector<2x128xf32> -> vector<2x128xf32>
    %103 = vector.broadcast %100 : vector<2x1xf32> to vector<2x128xf32>
    %104 = arith.addf %102, %103 : vector<2x128xf32>
    %105 = arith.subf %104, %101 : vector<2x128xf32>
    %106 = math.floor %104 : vector<2x128xf32>
    %107 = math.floor %105 : vector<2x128xf32>
    %108 = arith.cmpf ogt, %106, %107 : vector<2x128xf32>
    %109 = arith.extui %108 : vector<2x128xi1> to vector<2x128xi32>
    %110 = arith.sitofp %109 : vector<2x128xi32> to vector<2x128xf32>
    %c0_33 = arith.constant 0 : index
    %c512 = arith.constant 512 : index
    %111 = vector.load %arg4[%c0_33, %c512] : memref<2x1280xf32, #tpu.memory_space<vmem>>, vector<2x128xf32>
    tpu.vector_store %arg4[%c0_33, %c512], %110 {strides = array<i32>} : memref<2x1280xf32, #tpu.memory_space<vmem>>, vector<2x128xf32>,
    %c127_i32_34 = arith.constant 127 : i32
    %112 = vector.broadcast %c127_i32_34 : i32 to vector<1x128xi32>
    %113 = arith.cmpi eq, %14, %112 : vector<1x128xi32>
    %cst_35 = arith.constant 0.000000e+00 : f32
    %114 = vector.shape_cast %113 : vector<1x128xi1> to vector<1x128xi1>
    %115 = vector.broadcast %114 : vector<1x128xi1> to vector<2x128xi1>
    %116 = vector.broadcast %cst_35 : f32 to vector<2x128xf32>
    %117 = arith.select %115, %104, %116 : vector<2x128xi1>, vector<2x128xf32>
    %cst_36 = arith.constant dense<0.000000e+00> : vector<2xf32>
    %118 = vector.multi_reduction <add>, %117, %cst_36 [1] : vector<2x128xf32> to vector<2xf32>
    %119 = vector.shape_cast %118 : vector<2xf32> to vector<2x1xf32>
    %120 = vector.extract_strided_slice %12 {offsets = [0, 640], sizes = [2, 128], strides = [1, 1]} : vector<2x1280xf32> to vector<2x128xf32>
    %cst_37 = arith.constant dense<0.000000e+00> : vector<2x128xf32>
    %121 = tpu.matmul %120, %13, %cst_37 {dimension_numbers = #tpu.dot_dimension_numbers<[1], [0], [0], [1], [0, 0, 1, 1], [], []>} : vector<2x128xf32>, vector<128x128xf32>, vector<2x128xf32> -> vector<2x128xf32>
    %122 = vector.broadcast %119 : vector<2x1xf32> to vector<2x128xf32>
    %123 = arith.addf %121, %122 : vector<2x128xf32>
    %124 = arith.subf %123, %120 : vector<2x128xf32>
    %125 = math.floor %123 : vector<2x128xf32>
    %126 = math.floor %124 : vector<2x128xf32>
    %127 = arith.cmpf ogt, %125, %126 : vector<2x128xf32>
    %128 = arith.extui %127 : vector<2x128xi1> to vector<2x128xi32>
    %129 = arith.sitofp %128 : vector<2x128xi32> to vector<2x128xf32>
    %c0_38 = arith.constant 0 : index
    %c640 = arith.constant 640 : index
    %130 = vector.load %arg4[%c0_38, %c640] : memref<2x1280xf32, #tpu.memory_space<vmem>>, vector<2x128xf32>
    tpu.vector_store %arg4[%c0_38, %c640], %129 {strides = array<i32>} : memref<2x1280xf32, #tpu.memory_space<vmem>>, vector<2x128xf32>,
    %c127_i32_39 = arith.constant 127 : i32
    %131 = vector.broadcast %c127_i32_39 : i32 to vector<1x128xi32>
    %132 = arith.cmpi eq, %14, %131 : vector<1x128xi32>
    %cst_40 = arith.constant 0.000000e+00 : f32
    %133 = vector.shape_cast %132 : vector<1x128xi1> to vector<1x128xi1>
    %134 = vector.broadcast %133 : vector<1x128xi1> to vector<2x128xi1>
    %135 = vector.broadcast %cst_40 : f32 to vector<2x128xf32>
    %136 = arith.select %134, %123, %135 : vector<2x128xi1>, vector<2x128xf32>
    %cst_41 = arith.constant dense<0.000000e+00> : vector<2xf32>
    %137 = vector.multi_reduction <add>, %136, %cst_41 [1] : vector<2x128xf32> to vector<2xf32>
    %138 = vector.shape_cast %137 : vector<2xf32> to vector<2x1xf32>
    %139 = vector.extract_strided_slice %12 {offsets = [0, 768], sizes = [2, 128], strides = [1, 1]} : vector<2x1280xf32> to vector<2x128xf32>
    %cst_42 = arith.constant dense<0.000000e+00> : vector<2x128xf32>
    %140 = tpu.matmul %139, %13, %cst_42 {dimension_numbers = #tpu.dot_dimension_numbers<[1], [0], [0], [1], [0, 0, 1, 1], [], []>} : vector<2x128xf32>, vector<128x128xf32>, vector<2x128xf32> -> vector<2x128xf32>
    %141 = vector.broadcast %138 : vector<2x1xf32> to vector<2x128xf32>
    %142 = arith.addf %140, %141 : vector<2x128xf32>
    %143 = arith.subf %142, %139 : vector<2x128xf32>
    %144 = math.floor %142 : vector<2x128xf32>
    %145 = math.floor %143 : vector<2x128xf32>
    %146 = arith.cmpf ogt, %144, %145 : vector<2x128xf32>
    %147 = arith.extui %146 : vector<2x128xi1> to vector<2x128xi32>
    %148 = arith.sitofp %147 : vector<2x128xi32> to vector<2x128xf32>
    %c0_43 = arith.constant 0 : index
    %c768 = arith.constant 768 : index
    %149 = vector.load %arg4[%c0_43, %c768] : memref<2x1280xf32, #tpu.memory_space<vmem>>, vector<2x128xf32>
    tpu.vector_store %arg4[%c0_43, %c768], %148 {strides = array<i32>} : memref<2x1280xf32, #tpu.memory_space<vmem>>, vector<2x128xf32>,
    %c127_i32_44 = arith.constant 127 : i32
    %150 = vector.broadcast %c127_i32_44 : i32 to vector<1x128xi32>
    %151 = arith.cmpi eq, %14, %150 : vector<1x128xi32>
    %cst_45 = arith.constant 0.000000e+00 : f32
    %152 = vector.shape_cast %151 : vector<1x128xi1> to vector<1x128xi1>
    %153 = vector.broadcast %152 : vector<1x128xi1> to vector<2x128xi1>
    %154 = vector.broadcast %cst_45 : f32 to vector<2x128xf32>
    %155 = arith.select %153, %142, %154 : vector<2x128xi1>, vector<2x128xf32>
    %cst_46 = arith.constant dense<0.000000e+00> : vector<2xf32>
    %156 = vector.multi_reduction <add>, %155, %cst_46 [1] : vector<2x128xf32> to vector<2xf32>
    %157 = vector.shape_cast %156 : vector<2xf32> to vector<2x1xf32>
    %158 = vector.extract_strided_slice %12 {offsets = [0, 896], sizes = [2, 128], strides = [1, 1]} : vector<2x1280xf32> to vector<2x128xf32>
    %cst_47 = arith.constant dense<0.000000e+00> : vector<2x128xf32>
    %159 = tpu.matmul %158, %13, %cst_47 {dimension_numbers = #tpu.dot_dimension_numbers<[1], [0], [0], [1], [0, 0, 1, 1], [], []>} : vector<2x128xf32>, vector<128x128xf32>, vector<2x128xf32> -> vector<2x128xf32>
    %160 = vector.broadcast %157 : vector<2x1xf32> to vector<2x128xf32>
    %161 = arith.addf %159, %160 : vector<2x128xf32>
    %162 = arith.subf %161, %158 : vector<2x128xf32>
    %163 = math.floor %161 : vector<2x128xf32>
    %164 = math.floor %162 : vector<2x128xf32>
    %165 = arith.cmpf ogt, %163, %164 : vector<2x128xf32>
    %166 = arith.extui %165 : vector<2x128xi1> to vector<2x128xi32>
    %167 = arith.sitofp %166 : vector<2x128xi32> to vector<2x128xf32>
    %c0_48 = arith.constant 0 : index
    %c896 = arith.constant 896 : index
    %168 = vector.load %arg4[%c0_48, %c896] : memref<2x1280xf32, #tpu.memory_space<vmem>>, vector<2x128xf32>
    tpu.vector_store %arg4[%c0_48, %c896], %167 {strides = array<i32>} : memref<2x1280xf32, #tpu.memory_space<vmem>>, vector<2x128xf32>,
    %c127_i32_49 = arith.constant 127 : i32
    %169 = vector.broadcast %c127_i32_49 : i32 to vector<1x128xi32>
    %170 = arith.cmpi eq, %14, %169 : vector<1x128xi32>
    %cst_50 = arith.constant 0.000000e+00 : f32
    %171 = vector.shape_cast %170 : vector<1x128xi1> to vector<1x128xi1>
    %172 = vector.broadcast %171 : vector<1x128xi1> to vector<2x128xi1>
    %173 = vector.broadcast %cst_50 : f32 to vector<2x128xf32>
    %174 = arith.select %172, %161, %173 : vector<2x128xi1>, vector<2x128xf32>
    %cst_51 = arith.constant dense<0.000000e+00> : vector<2xf32>
    %175 = vector.multi_reduction <add>, %174, %cst_51 [1] : vector<2x128xf32> to vector<2xf32>
    %176 = vector.shape_cast %175 : vector<2xf32> to vector<2x1xf32>
    %177 = vector.extract_strided_slice %12 {offsets = [0, 1024], sizes = [2, 128], strides = [1, 1]} : vector<2x1280xf32> to vector<2x128xf32>
    %cst_52 = arith.constant dense<0.000000e+00> : vector<2x128xf32>
    %178 = tpu.matmul %177, %13, %cst_52 {dimension_numbers = #tpu.dot_dimension_numbers<[1], [0], [0], [1], [0, 0, 1, 1], [], []>} : vector<2x128xf32>, vector<128x128xf32>, vector<2x128xf32> -> vector<2x128xf32>
    %179 = vector.broadcast %176 : vector<2x1xf32> to vector<2x128xf32>
    %180 = arith.addf %178, %179 : vector<2x128xf32>
    %181 = arith.subf %180, %177 : vector<2x128xf32>
    %182 = math.floor %180 : vector<2x128xf32>
    %183 = math.floor %181 : vector<2x128xf32>
    %184 = arith.cmpf ogt, %182, %183 : vector<2x128xf32>
    %185 = arith.extui %184 : vector<2x128xi1> to vector<2x128xi32>
    %186 = arith.sitofp %185 : vector<2x128xi32> to vector<2x128xf32>
    %c0_53 = arith.constant 0 : index
    %c1024 = arith.constant 1024 : index
    %187 = vector.load %arg4[%c0_53, %c1024] : memref<2x1280xf32, #tpu.memory_space<vmem>>, vector<2x128xf32>
    tpu.vector_store %arg4[%c0_53, %c1024], %186 {strides = array<i32>} : memref<2x1280xf32, #tpu.memory_space<vmem>>, vector<2x128xf32>,
    %c127_i32_54 = arith.constant 127 : i32
    %188 = vector.broadcast %c127_i32_54 : i32 to vector<1x128xi32>
    %189 = arith.cmpi eq, %14, %188 : vector<1x128xi32>
    %cst_55 = arith.constant 0.000000e+00 : f32
    %190 = vector.shape_cast %189 : vector<1x128xi1> to vector<1x128xi1>
    %191 = vector.broadcast %190 : vector<1x128xi1> to vector<2x128xi1>
    %192 = vector.broadcast %cst_55 : f32 to vector<2x128xf32>
    %193 = arith.select %191, %180, %192 : vector<2x128xi1>, vector<2x128xf32>
    %cst_56 = arith.constant dense<0.000000e+00> : vector<2xf32>
    %194 = vector.multi_reduction <add>, %193, %cst_56 [1] : vector<2x128xf32> to vector<2xf32>
    %195 = vector.shape_cast %194 : vector<2xf32> to vector<2x1xf32>
    %196 = vector.extract_strided_slice %12 {offsets = [0, 1152], sizes = [2, 128], strides = [1, 1]} : vector<2x1280xf32> to vector<2x128xf32>
    %cst_57 = arith.constant dense<0.000000e+00> : vector<2x128xf32>
    %197 = tpu.matmul %196, %13, %cst_57 {dimension_numbers = #tpu.dot_dimension_numbers<[1], [0], [0], [1], [0, 0, 1, 1], [], []>} : vector<2x128xf32>, vector<128x128xf32>, vector<2x128xf32> -> vector<2x128xf32>
    %198 = vector.broadcast %195 : vector<2x1xf32> to vector<2x128xf32>
    %199 = arith.addf %197, %198 : vector<2x128xf32>
    %200 = arith.subf %199, %196 : vector<2x128xf32>
    %201 = math.floor %199 : vector<2x128xf32>
    %202 = math.floor %200 : vector<2x128xf32>
    %203 = arith.cmpf ogt, %201, %202 : vector<2x128xf32>
    %204 = arith.extui %203 : vector<2x128xi1> to vector<2x128xi32>
    %205 = arith.sitofp %204 : vector<2x128xi32> to vector<2x128xf32>
    %c0_58 = arith.constant 0 : index
    %c1152 = arith.constant 1152 : index
    %206 = vector.load %arg4[%c0_58, %c1152] : memref<2x1280xf32, #tpu.memory_space<vmem>>, vector<2x128xf32>
    tpu.vector_store %arg4[%c0_58, %c1152], %205 {strides = array<i32>} : memref<2x1280xf32, #tpu.memory_space<vmem>>, vector<2x128xf32>,
    %c127_i32_59 = arith.constant 127 : i32
    %207 = vector.broadcast %c127_i32_59 : i32 to vector<1x128xi32>
    %208 = arith.cmpi eq, %14, %207 : vector<1x128xi32>
    %cst_60 = arith.constant 0.000000e+00 : f32
    %209 = vector.shape_cast %208 : vector<1x128xi1> to vector<1x128xi1>
    %210 = vector.broadcast %209 : vector<1x128xi1> to vector<2x128xi1>
    %211 = vector.broadcast %cst_60 : f32 to vector<2x128xf32>
    %212 = arith.select %210, %199, %211 : vector<2x128xi1>, vector<2x128xf32>
    %cst_61 = arith.constant dense<0.000000e+00> : vector<2xf32>
    %213 = vector.multi_reduction <add>, %212, %cst_61 [1] : vector<2x128xf32> to vector<2xf32>
    %214 = vector.shape_cast %213 : vector<2xf32> to vector<2x1xf32>
    %c0_62 = arith.constant 0 : index
    %c0_63 = arith.constant 0 : index
    %215 = vector.load %arg5[%c0_62, %c0_63] : memref<2x1xf32, #tpu.memory_space<vmem>>, vector<2x1xf32>
    tpu.vector_store %arg5[%c0_62, %c0_63], %214 {strides = array<i32>} : memref<2x1xf32, #tpu.memory_space<vmem>>, vector<2x1xf32>,
    return
  }
  func.func @transform_0(%arg0: i32) -> (i32, i32) {
    %c0_i32 = arith.constant 0 : i32
    %c0_i32_0 = arith.constant 0 : i32
    %c0_i32_1 = arith.constant 0 : i32
    return %c0_i32, %c0_i32_0 : i32, i32
  }
  func.func @transform_1(%arg0: i32) -> (i32, i32) {
    %c0_i32 = arith.constant 0 : i32
    %c0_i32_0 = arith.constant 0 : i32
    %c0_i32_1 = arith.constant 0 : i32
    return %c0_i32, %c0_i32_0 : i32, i32
  }
  func.func @transform_2(%arg0: i32) -> (i32, i32) {
    %c0_i32 = arith.constant 0 : i32
    %c0_i32_0 = arith.constant 0 : i32
    %c0_i32_1 = arith.constant 0 : i32
    return %c0_i32, %c0_i32_0 : i32, i32
  }
  func.func @transform_3(%arg0: i32) -> (i32, i32) {
    %c0_i32 = arith.constant 0 : i32
    %c0_i32_0 = arith.constant 0 : i32
    return %c0_i32, %arg0 : i32, i32
  }
}

</mosaic_0001>

<llo_original>
// kernel: _lambda_.1
$region0: #{_lambda_.1}
  #allocation0 [shape = 'u32[]', space=smem, size = 0x4, offset = 0x4, fixed_abs, tag = 'smem constant byte address 0x4 - core index']
  #allocation1 [shape = 'u32[144,128]{1,0:T(1,128)}', space=vmem, size = 0x12000, scoped, tag = 'internal scratch']
  #allocation2 [shape = 'f32[2,1]{1,0:T(2,128)}', space=vmem, size = 0x400, scoped, tag = 'scratch operand']
  %s0 = inlined_call_operand.vmem [shape: f32[2,256], index: 0, kind: input, shape index: {}]
  %s1 = inlined_call_operand.hbm [shape: f32[256,1280], index: 1, kind: input, shape index: {}]
  %s2 = inlined_call_operand.hbm [shape: f32[128,128], index: 2, kind: input, shape index: {}]
  %s3 = inlined_call_operand.vmem [shape: f32[2,1280], index: 3, kind: output, shape index: {}]
  %s4 = sld [smem:[#allocation0]]
  $region34: #{_lambda_.1} parent=0
    _
  %s6 = ssub.s32 1, %s4
  %s7 = scalar_select 0, %s6, %s4
  $region1: #{_lambda_.1} parent=0
    #allocation3 [shape = 'u8[1310720]{0}', space=vmem, size = 0x140000, scoped, tag = 'input window, operand 1, single buffered']
    #allocation4 [shape = 's32[1]{0}', space=sflag, size = 0x4, scoped, tag = 'scoped memory for _lambda_.1']
    #allocation5 [shape = 'u8[65536]{0}', space=vmem, size = 0x10000, scoped, tag = 'input window, operand 2, single buffered']
    #allocation6 [shape = 's32[1]{0}', space=sflag, size = 0x4, scoped, tag = 'scoped memory for _lambda_.1']
    %8 = vsyncpa [#allocation4], 0
    %9 = vsyncpa [#allocation6], 0
    // Predicated region
    $region2: #{_lambda_.1} parent=1 // pred_check
      _
    $region3: #{_lambda_.1} parent=1 // pred_check_branch
      %11 = sbr.rel (0) target = $region5
    $region4: #{_lambda_.1} parent=1 // pred_region
      _
    $region5: #{_lambda_.1} parent=1 // pred_fallthru
      _
    // Predicated region
    $region6: #{_lambda_.1} parent=1 // pred_check
      _
    $region7: #{_lambda_.1} parent=1 // pred_check_branch
      %13 = sbr.rel (0) target = $region9
    $region8: #{_lambda_.1} parent=1 // pred_region
      %s15 = ssub.s32 40960, 40960
      %16 = vsyncadd [#allocation4], %s15
      %s17 = sshll.u32 [#allocation3], 4
      %s18 = int_to_ptr.vmem [resolvable:$true] %s17
      %23 = dma.hbm_to_vmem [thread:$0]  %s1, 40960, %s18, [#allocation4], 1280, 1280, 80
    $region9: #{_lambda_.1} parent=1 // pred_fallthru
      _
    // Predicated region
    $region10: #{_lambda_.1} parent=1 // pred_check
      _
    $region11: #{_lambda_.1} parent=1 // pred_check_branch
      %25 = sbr.rel (0) target = $region13
    $region12: #{_lambda_.1} parent=1 // pred_region
      %s27 = ssub.s32 2048, 2048
      %28 = vsyncadd [#allocation6], %s27
      %s29 = sshll.u32 [#allocation5], 4
      %s30 = int_to_ptr.vmem [resolvable:$true] %s29
      %35 = dma.hbm_to_vmem [thread:$0]  %s2, 2048, %s30, [#allocation6], 128, 128, 8
    $region13: #{_lambda_.1} parent=1 // pred_fallthru
      _
    // Predicated region
    $region14: #{_lambda_.1} parent=1 // pred_check
      _
    $region15: #{_lambda_.1} parent=1 // pred_check_branch
      %37 = sbr.rel (0) target = $region17
    $region16: #{_lambda_.1} parent=1 // pred_region
      %38 = dma.done [#allocation4], 40960
    $region17: #{_lambda_.1} parent=1 // pred_fallthru
      _
    // Predicated region
    $region18: #{_lambda_.1} parent=1 // pred_check
      _
    $region19: #{_lambda_.1} parent=1 // pred_check_branch
      %40 = sbr.rel (0) target = $region21
    $region20: #{_lambda_.1} parent=1 // pred_region
      %41 = dma.done [#allocation6], 2048
    $region21: #{_lambda_.1} parent=1 // pred_fallthru
      _
    %p42 = scmp.eq.s32.totalorder 0, 0
    // Predicated region
    $region22: #{_lambda_.1} parent=1 // pred_check
      %p43 = pneg %p42
    $region23: #{_lambda_.1} parent=1 // pred_check_branch
      %45 = sbr.rel (%p43) target = $region25
    $region24: #{_lambda_.1} parent=1 // pred_region
      %vm46 = vcmask 1024
      %47 = vst.msk [vmem:[#allocation2] sm:$0x3] %vm46, 0.0
    $region25: #{_lambda_.1} parent=1 // pred_fallthru
      _
    %s48 = smul.u32 0, 128
    %s49 = sshra.s32 %s48, 7
    %s50 = sand.u32 %s48, 127
    %s51 = smul.addr %s49, 2
    %s52 = scalar_lea.vmem %s0, %s51
    %v53 = vld [vmem:[%s52] sm:$0xf]
    %v54 = vmul.f32 %v53, 0.5
    %v55 = vadd.f32 %v54, 0.5
    %v56 = vld [vmem:[#allocation3] sm:$0xff]
    %v57 = vld [vmem:[#allocation3 + $0x8] sm:$0xff]
    %v58 = vld [vmem:[#allocation3 + $0x10] sm:$0xff]
    %v59 = vld [vmem:[#allocation3 + $0x18] sm:$0xff]
    %v60 = vld [vmem:[#allocation3 + $0x20] sm:$0xff]
    %v61 = vld [vmem:[#allocation3 + $0x28] sm:$0xff]
    %v62 = vld [vmem:[#allocation3 + $0x30] sm:$0xff]
    %v63 = vld [vmem:[#allocation3 + $0x38] sm:$0xff]
    %v64 = vld [vmem:[#allocation3 + $0x40] sm:$0xff]
    %v65 = vld [vmem:[#allocation3 + $0x48] sm:$0xff]
    %v66 = vld [vmem:[#allocation3 + $0x50] sm:$0xff]
    %v67 = vld [vmem:[#allocation3 + $0x58] sm:$0xff]
    %v68 = vld [vmem:[#allocation3 + $0x60] sm:$0xff]
    %v69 = vld [vmem:[#allocation3 + $0x68] sm:$0xff]
    %v70 = vld [vmem:[#allocation3 + $0x70] sm:$0xff]
    %v71 = vld [vmem:[#allocation3 + $0x78] sm:$0xff]
    %v72 = vld [vmem:[#allocation3 + $0x80] sm:$0xff]
    %v73 = vld [vmem:[#allocation3 + $0x88] sm:$0xff]
    %v74 = vld [vmem:[#allocation3 + $0x90] sm:$0xff]
    %v75 = vld [vmem:[#allocation3 + $0x98] sm:$0xff]
    %v76 = vld [vmem:[#allocation3 + $0xa0] sm:$0xff]
    %v77 = vld [vmem:[#allocation3 + $0xa8] sm:$0xff]
    %v78 = vld [vmem:[#allocation3 + $0xb0] sm:$0xff]
    %v79 = vld [vmem:[#allocation3 + $0xb8] sm:$0xff]
    %v80 = vld [vmem:[#allocation3 + $0xc0] sm:$0xff]
    %v81 = vld [vmem:[#allocation3 + $0xc8] sm:$0xff]
    %v82 = vld [vmem:[#allocation3 + $0xd0] sm:$0xff]
    %v83 = vld [vmem:[#allocation3 + $0xd8] sm:$0xff]
    %v84 = vld [vmem:[#allocation3 + $0xe0] sm:$0xff]
    %v85 = vld [vmem:[#allocation3 + $0xe8] sm:$0xff]
    %v86 = vld [vmem:[#allocation3 + $0xf0] sm:$0xff]
    %v87 = vld [vmem:[#allocation3 + $0xf8] sm:$0xff]
    %v88 = vld [vmem:[#allocation3 + $0x100] sm:$0xff]
    %v89 = vld [vmem:[#allocation3 + $0x108] sm:$0xff]
    %v90 = vld [vmem:[#allocation3 + $0x110] sm:$0xff]
    %v91 = vld [vmem:[#allocation3 + $0x118] sm:$0xff]
    %v92 = vld [vmem:[#allocation3 + $0x120] sm:$0xff]
    %v93 = vld [vmem:[#allocation3 + $0x128] sm:$0xff]
    %v94 = vld [vmem:[#allocation3 + $0x130] sm:$0xff]
    %v95 = vld [vmem:[#allocation3 + $0x138] sm:$0xff]
    %v96 = vld [vmem:[#allocation3 + $0x140] sm:$0xff]
    %v97 = vld [vmem:[#allocation3 + $0x148] sm:$0xff]
    %v98 = vld [vmem:[#allocation3 + $0x150] sm:$0xff]
    %v99 = vld [vmem:[#allocation3 + $0x158] sm:$0xff]
    %v100 = vld [vmem:[#allocation3 + $0x160] sm:$0xff]
    %v101 = vld [vmem:[#allocation3 + $0x168] sm:$0xff]
    %v102 = vld [vmem:[#allocation3 + $0x170] sm:$0xff]
    %v103 = vld [vmem:[#allocation3 + $0x178] sm:$0xff]
    %v104 = vld [vmem:[#allocation3 + $0x180] sm:$0xff]
    %v105 = vld [vmem:[#allocation3 + $0x188] sm:$0xff]
    %v106 = vld [vmem:[#allocation3 + $0x190] sm:$0xff]
    %v107 = vld [vmem:[#allocation3 + $0x198] sm:$0xff]
    %v108 = vld [vmem:[#allocation3 + $0x1a0] sm:$0xff]
    %v109 = vld [vmem:[#allocation3 + $0x1a8] sm:$0xff]
    %v110 = vld [vmem:[#allocation3 + $0x1b0] sm:$0xff]
    %v111 = vld [vmem:[#allocation3 + $0x1b8] sm:$0xff]
    %v112 = vld [vmem:[#allocation3 + $0x1c0] sm:$0xff]
    %v113 = vld [vmem:[#allocation3 + $0x1c8] sm:$0xff]
    %v114 = vld [vmem:[#allocation3 + $0x1d0] sm:$0xff]
    %v115 = vld [vmem:[#allocation3 + $0x1d8] sm:$0xff]
    %v116 = vld [vmem:[#allocation3 + $0x1e0] sm:$0xff]
    %v117 = vld [vmem:[#allocation3 + $0x1e8] sm:$0xff]
    %v118 = vld [vmem:[#allocation3 + $0x1f0] sm:$0xff]
    %v119 = vld [vmem:[#allocation3 + $0x1f8] sm:$0xff]
    %v120 = vld [vmem:[#allocation3 + $0x200] sm:$0xff]
    %v121 = vld [vmem:[#allocation3 + $0x208] sm:$0xff]
    %v122 = vld [vmem:[#allocation3 + $0x210] sm:$0xff]
    %v123 = vld [vmem:[#allocation3 + $0x218] sm:$0xff]
    %v124 = vld [vmem:[#allocation3 + $0x220] sm:$0xff]
    %v125 = vld [vmem:[#allocation3 + $0x228] sm:$0xff]
    %v126 = vld [vmem:[#allocation3 + $0x230] sm:$0xff]
    %v127 = vld [vmem:[#allocation3 + $0x238] sm:$0xff]
    %v128 = vld [vmem:[#allocation3 + $0x240] sm:$0xff]
    %v129 = vld [vmem:[#allocation3 + $0x248] sm:$0xff]
    %v130 = vld [vmem:[#allocation3 + $0x250] sm:$0xff]
    %v131 = vld [vmem:[#allocation3 + $0x258] sm:$0xff]
    %v132 = vld [vmem:[#allocation3 + $0x260] sm:$0xff]
    %v133 = vld [vmem:[#allocation3 + $0x268] sm:$0xff]
    %v134 = vld [vmem:[#allocation3 + $0x270] sm:$0xff]
    %v135 = vld [vmem:[#allocation3 + $0x278] sm:$0xff]
    %v136 = vld [vmem:[#allocation3 + $0x280] sm:$0xff]
    %v137 = vld [vmem:[#allocation3 + $0x288] sm:$0xff]
    %v138 = vld [vmem:[#allocation3 + $0x290] sm:$0xff]
    %v139 = vld [vmem:[#allocation3 + $0x298] sm:$0xff]
    %v140 = vld [vmem:[#allocation3 + $0x2a0] sm:$0xff]
    %v141 = vld [vmem:[#allocation3 + $0x2a8] sm:$0xff]
    %v142 = vld [vmem:[#allocation3 + $0x2b0] sm:$0xff]
    %v143 = vld [vmem:[#allocation3 + $0x2b8] sm:$0xff]
    %v144 = vld [vmem:[#allocation3 + $0x2c0] sm:$0xff]
    %v145 = vld [vmem:[#allocation3 + $0x2c8] sm:$0xff]
    %v146 = vld [vmem:[#allocation3 + $0x2d0] sm:$0xff]
    %v147 = vld [vmem:[#allocation3 + $0x2d8] sm:$0xff]
    %v148 = vld [vmem:[#allocation3 + $0x2e0] sm:$0xff]
    %v149 = vld [vmem:[#allocation3 + $0x2e8] sm:$0xff]
    %v150 = vld [vmem:[#allocation3 + $0x2f0] sm:$0xff]
    %v151 = vld [vmem:[#allocation3 + $0x2f8] sm:$0xff]
    %v152 = vld [vmem:[#allocation3 + $0x300] sm:$0xff]
    %v153 = vld [vmem:[#allocation3 + $0x308] sm:$0xff]
    %v154 = vld [vmem:[#allocation3 + $0x310] sm:$0xff]
    %v155 = vld [vmem:[#allocation3 + $0x318] sm:$0xff]
    %v156 = vld [vmem:[#allocation3 + $0x320] sm:$0xff]
    %v157 = vld [vmem:[#allocation3 + $0x328] sm:$0xff]
    %v158 = vld [vmem:[#allocation3 + $0x330] sm:$0xff]
    %v159 = vld [vmem:[#allocation3 + $0x338] sm:$0xff]
    %v160 = vld [vmem:[#allocation3 + $0x340] sm:$0xff]
    %v161 = vld [vmem:[#allocation3 + $0x348] sm:$0xff]
    %v162 = vld [vmem:[#allocation3 + $0x350] sm:$0xff]
    %v163 = vld [vmem:[#allocation3 + $0x358] sm:$0xff]
    %v164 = vld [vmem:[#allocation3 + $0x360] sm:$0xff]
    %v165 = vld [vmem:[#allocation3 + $0x368] sm:$0xff]
    %v166 = vld [vmem:[#allocation3 + $0x370] sm:$0xff]
    %v167 = vld [vmem:[#allocation3 + $0x378] sm:$0xff]
    %v168 = vld [vmem:[#allocation3 + $0x380] sm:$0xff]
    %v169 = vld [vmem:[#allocation3 + $0x388] sm:$0xff]
    %v170 = vld [vmem:[#allocation3 + $0x390] sm:$0xff]
    %v171 = vld [vmem:[#allocation3 + $0x398] sm:$0xff]
    %v172 = vld [vmem:[#allocation3 + $0x3a0] sm:$0xff]
    %v173 = vld [vmem:[#allocation3 + $0x3a8] sm:$0xff]
    %v174 = vld [vmem:[#allocation3 + $0x3b0] sm:$0xff]
    %v175 = vld [vmem:[#allocation3 + $0x3b8] sm:$0xff]
    %v176 = vld [vmem:[#allocation3 + $0x3c0] sm:$0xff]
    %v177 = vld [vmem:[#allocation3 + $0x3c8] sm:$0xff]
    %v178 = vld [vmem:[#allocation3 + $0x3d0] sm:$0xff]
    %v179 = vld [vmem:[#allocation3 + $0x3d8] sm:$0xff]
    %v180 = vld [vmem:[#allocation3 + $0x3e0] sm:$0xff]
    %v181 = vld [vmem:[#allocation3 + $0x3e8] sm:$0xff]
    %v182 = vld [vmem:[#allocation3 + $0x3f0] sm:$0xff]
    %v183 = vld [vmem:[#allocation3 + $0x3f8] sm:$0xff]
    %v184 = vld [vmem:[#allocation3 + $0x400] sm:$0xff]
    %v185 = vld [vmem:[#allocation3 + $0x408] sm:$0xff]
    %v186 = vld [vmem:[#allocation3 + $0x410] sm:$0xff]
    %v187 = vld [vmem:[#allocation3 + $0x418] sm:$0xff]
    %v188 = vld [vmem:[#allocation3 + $0x420] sm:$0xff]
    %v189 = vld [vmem:[#allocation3 + $0x428] sm:$0xff]
    %v190 = vld [vmem:[#allocation3 + $0x430] sm:$0xff]
    %v191 = vld [vmem:[#allocation3 + $0x438] sm:$0xff]
    %v192 = vld [vmem:[#allocation3 + $0x440] sm:$0xff]
    %v193 = vld [vmem:[#allocation3 + $0x448] sm:$0xff]
    %v194 = vld [vmem:[#allocation3 + $0x450] sm:$0xff]
    %v195 = vld [vmem:[#allocation3 + $0x458] sm:$0xff]
    %v196 = vld [vmem:[#allocation3 + $0x460] sm:$0xff]
    %v197 = vld [vmem:[#allocation3 + $0x468] sm:$0xff]
    %v198 = vld [vmem:[#allocation3 + $0x470] sm:$0xff]
    %v199 = vld [vmem:[#allocation3 + $0x478] sm:$0xff]
    %v200 = vld [vmem:[#allocation3 + $0x480] sm:$0xff]
    %v201 = vld [vmem:[#allocation3 + $0x488] sm:$0xff]
    %v202 = vld [vmem:[#allocation3 + $0x490] sm:$0xff]
    %v203 = vld [vmem:[#allocation3 + $0x498] sm:$0xff]
    %v204 = vld [vmem:[#allocation3 + $0x4a0] sm:$0xff]
    %v205 = vld [vmem:[#allocation3 + $0x4a8] sm:$0xff]
    %v206 = vld [vmem:[#allocation3 + $0x4b0] sm:$0xff]
    %v207 = vld [vmem:[#allocation3 + $0x4b8] sm:$0xff]
    %v208 = vld [vmem:[#allocation3 + $0x4c0] sm:$0xff]
    %v209 = vld [vmem:[#allocation3 + $0x4c8] sm:$0xff]
    %v210 = vld [vmem:[#allocation3 + $0x4d0] sm:$0xff]
    %v211 = vld [vmem:[#allocation3 + $0x4d8] sm:$0xff]
    %v212 = vld [vmem:[#allocation3 + $0x4e0] sm:$0xff]
    %v213 = vld [vmem:[#allocation3 + $0x4e8] sm:$0xff]
    %v214 = vld [vmem:[#allocation3 + $0x4f0] sm:$0xff]
    %v215 = vld [vmem:[#allocation3 + $0x4f8] sm:$0xff]
    %v216 = vld [vmem:[#allocation3 + $0x500] sm:$0xff]
    %v217 = vld [vmem:[#allocation3 + $0x508] sm:$0xff]
    %v218 = vld [vmem:[#allocation3 + $0x510] sm:$0xff]
    %v219 = vld [vmem:[#allocation3 + $0x518] sm:$0xff]
    %v220 = vld [vmem:[#allocation3 + $0x520] sm:$0xff]
    %v221 = vld [vmem:[#allocation3 + $0x528] sm:$0xff]
    %v222 = vld [vmem:[#allocation3 + $0x530] sm:$0xff]
    %v223 = vld [vmem:[#allocation3 + $0x538] sm:$0xff]
    %v224 = vld [vmem:[#allocation3 + $0x540] sm:$0xff]
    %v225 = vld [vmem:[#allocation3 + $0x548] sm:$0xff]
    %v226 = vld [vmem:[#allocation3 + $0x550] sm:$0xff]
    %v227 = vld [vmem:[#allocation3 + $0x558] sm:$0xff]
    %v228 = vld [vmem:[#allocation3 + $0x560] sm:$0xff]
    %v229 = vld [vmem:[#allocation3 + $0x568] sm:$0xff]
    %v230 = vld [vmem:[#allocation3 + $0x570] sm:$0xff]
    %v231 = vld [vmem:[#allocation3 + $0x578] sm:$0xff]
    %v232 = vld [vmem:[#allocation3 + $0x580] sm:$0xff]
    %v233 = vld [vmem:[#allocation3 + $0x588] sm:$0xff]
    %v234 = vld [vmem:[#allocation3 + $0x590] sm:$0xff]
    %v235 = vld [vmem:[#allocation3 + $0x598] sm:$0xff]
    %v236 = vld [vmem:[#allocation3 + $0x5a0] sm:$0xff]
    %v237 = vld [vmem:[#allocation3 + $0x5a8] sm:$0xff]
    %v238 = vld [vmem:[#allocation3 + $0x5b0] sm:$0xff]
    %v239 = vld [vmem:[#allocation3 + $0x5b8] sm:$0xff]
    %v240 = vld [vmem:[#allocation3 + $0x5c0] sm:$0xff]
    %v241 = vld [vmem:[#allocation3 + $0x5c8] sm:$0xff]
    %v242 = vld [vmem:[#allocation3 + $0x5d0] sm:$0xff]
    %v243 = vld [vmem:[#allocation3 + $0x5d8] sm:$0xff]
    %v244 = vld [vmem:[#allocation3 + $0x5e0] sm:$0xff]
    %v245 = vld [vmem:[#allocation3 + $0x5e8] sm:$0xff]
    %v246 = vld [vmem:[#allocation3 + $0x5f0] sm:$0xff]
    %v247 = vld [vmem:[#allocation3 + $0x5f8] sm:$0xff]
    %v248 = vld [vmem:[#allocation3 + $0x600] sm:$0xff]
    %v249 = vld [vmem:[#allocation3 + $0x608] sm:$0xff]
    %v250 = vld [vmem:[#allocation3 + $0x610] sm:$0xff]
    %v251 = vld [vmem:[#allocation3 + $0x618] sm:$0xff]
    %v252 = vld [vmem:[#allocation3 + $0x620] sm:$0xff]
    %v253 = vld [vmem:[#allocation3 + $0x628] sm:$0xff]
    %v254 = vld [vmem:[#allocation3 + $0x630] sm:$0xff]
    %v255 = vld [vmem:[#allocation3 + $0x638] sm:$0xff]
    %v256 = vld [vmem:[#allocation3 + $0x640] sm:$0xff]
    %v257 = vld [vmem:[#allocation3 + $0x648] sm:$0xff]
    %v258 = vld [vmem:[#allocation3 + $0x650] sm:$0xff]
    %v259 = vld [vmem:[#allocation3 + $0x658] sm:$0xff]
    %v260 = vld [vmem:[#allocation3 + $0x660] sm:$0xff]
    %v261 = vld [vmem:[#allocation3 + $0x668] sm:$0xff]
    %v262 = vld [vmem:[#allocation3 + $0x670] sm:$0xff]
    %v263 = vld [vmem:[#allocation3 + $0x678] sm:$0xff]
    %v264 = vld [vmem:[#allocation3 + $0x680] sm:$0xff]
    %v265 = vld [vmem:[#allocation3 + $0x688] sm:$0xff]
    %v266 = vld [vmem:[#allocation3 + $0x690] sm:$0xff]
    %v267 = vld [vmem:[#allocation3 + $0x698] sm:$0xff]
    %v268 = vld [vmem:[#allocation3 + $0x6a0] sm:$0xff]
    %v269 = vld [vmem:[#allocation3 + $0x6a8] sm:$0xff]
    %v270 = vld [vmem:[#allocation3 + $0x6b0] sm:$0xff]
    %v271 = vld [vmem:[#allocation3 + $0x6b8] sm:$0xff]
    %v272 = vld [vmem:[#allocation3 + $0x6c0] sm:$0xff]
    %v273 = vld [vmem:[#allocation3 + $0x6c8] sm:$0xff]
    %v274 = vld [vmem:[#allocation3 + $0x6d0] sm:$0xff]
    %v275 = vld [vmem:[#allocation3 + $0x6d8] sm:$0xff]
    %v276 = vld [vmem:[#allocation3 + $0x6e0] sm:$0xff]
    %v277 = vld [vmem:[#allocation3 + $0x6e8] sm:$0xff]
    %v278 = vld [vmem:[#allocation3 + $0x6f0] sm:$0xff]
    %v279 = vld [vmem:[#allocation3 + $0x6f8] sm:$0xff]
    %v280 = vld [vmem:[#allocation3 + $0x700] sm:$0xff]
    %v281 = vld [vmem:[#allocation3 + $0x708] sm:$0xff]
    %v282 = vld [vmem:[#allocation3 + $0x710] sm:$0xff]
    %v283 = vld [vmem:[#allocation3 + $0x718] sm:$0xff]
    %v284 = vld [vmem:[#allocation3 + $0x720] sm:$0xff]
    %v285 = vld [vmem:[#allocation3 + $0x728] sm:$0xff]
    %v286 = vld [vmem:[#allocation3 + $0x730] sm:$0xff]
    %v287 = vld [vmem:[#allocation3 + $0x738] sm:$0xff]
    %v288 = vld [vmem:[#allocation3 + $0x740] sm:$0xff]
    %v289 = vld [vmem:[#allocation3 + $0x748] sm:$0xff]
    %v290 = vld [vmem:[#allocation3 + $0x750] sm:$0xff]
    %v291 = vld [vmem:[#allocation3 + $0x758] sm:$0xff]
    %v292 = vld [vmem:[#allocation3 + $0x760] sm:$0xff]
    %v293 = vld [vmem:[#allocation3 + $0x768] sm:$0xff]
    %v294 = vld [vmem:[#allocation3 + $0x770] sm:$0xff]
    %v295 = vld [vmem:[#allocation3 + $0x778] sm:$0xff]
    %v296 = vld [vmem:[#allocation3 + $0x780] sm:$0xff]
    %v297 = vld [vmem:[#allocation3 + $0x788] sm:$0xff]
    %v298 = vld [vmem:[#allocation3 + $0x790] sm:$0xff]
    %v299 = vld [vmem:[#allocation3 + $0x798] sm:$0xff]
    %v300 = vld [vmem:[#allocation3 + $0x7a0] sm:$0xff]
    %v301 = vld [vmem:[#allocation3 + $0x7a8] sm:$0xff]
    %v302 = vld [vmem:[#allocation3 + $0x7b0] sm:$0xff]
    %v303 = vld [vmem:[#allocation3 + $0x7b8] sm:$0xff]
    %v304 = vld [vmem:[#allocation3 + $0x7c0] sm:$0xff]
    %v305 = vld [vmem:[#allocation3 + $0x7c8] sm:$0xff]
    %v306 = vld [vmem:[#allocation3 + $0x7d0] sm:$0xff]
    %v307 = vld [vmem:[#allocation3 + $0x7d8] sm:$0xff]
    %v308 = vld [vmem:[#allocation3 + $0x7e0] sm:$0xff]
    %v309 = vld [vmem:[#allocation3 + $0x7e8] sm:$0xff]
    %v310 = vld [vmem:[#allocation3 + $0x7f0] sm:$0xff]
    %v311 = vld [vmem:[#allocation3 + $0x7f8] sm:$0xff]
    %v312 = vld [vmem:[#allocation3 + $0x800] sm:$0xff]
    %v313 = vld [vmem:[#allocation3 + $0x808] sm:$0xff]
    %v314 = vld [vmem:[#allocation3 + $0x810] sm:$0xff]
    %v315 = vld [vmem:[#allocation3 + $0x818] sm:$0xff]
    %v316 = vld [vmem:[#allocation3 + $0x820] sm:$0xff]
    %v317 = vld [vmem:[#allocation3 + $0x828] sm:$0xff]
    %v318 = vld [vmem:[#allocation3 + $0x830] sm:$0xff]
    %v319 = vld [vmem:[#allocation3 + $0x838] sm:$0xff]
    %v320 = vld [vmem:[#allocation3 + $0x840] sm:$0xff]
    %v321 = vld [vmem:[#allocation3 + $0x848] sm:$0xff]
    %v322 = vld [vmem:[#allocation3 + $0x850] sm:$0xff]
    %v323 = vld [vmem:[#allocation3 + $0x858] sm:$0xff]
    %v324 = vld [vmem:[#allocation3 + $0x860] sm:$0xff]
    %v325 = vld [vmem:[#allocation3 + $0x868] sm:$0xff]
    %v326 = vld [vmem:[#allocation3 + $0x870] sm:$0xff]
    %v327 = vld [vmem:[#allocation3 + $0x878] sm:$0xff]
    %v328 = vld [vmem:[#allocation3 + $0x880] sm:$0xff]
    %v329 = vld [vmem:[#allocation3 + $0x888] sm:$0xff]
    %v330 = vld [vmem:[#allocation3 + $0x890] sm:$0xff]
    %v331 = vld [vmem:[#allocation3 + $0x898] sm:$0xff]
    %v332 = vld [vmem:[#allocation3 + $0x8a0] sm:$0xff]
    %v333 = vld [vmem:[#allocation3 + $0x8a8] sm:$0xff]
    %v334 = vld [vmem:[#allocation3 + $0x8b0] sm:$0xff]
    %v335 = vld [vmem:[#allocation3 + $0x8b8] sm:$0xff]
    %v336 = vld [vmem:[#allocation3 + $0x8c0] sm:$0xff]
    %v337 = vld [vmem:[#allocation3 + $0x8c8] sm:$0xff]
    %v338 = vld [vmem:[#allocation3 + $0x8d0] sm:$0xff]
    %v339 = vld [vmem:[#allocation3 + $0x8d8] sm:$0xff]
    %v340 = vld [vmem:[#allocation3 + $0x8e0] sm:$0xff]
    %v341 = vld [vmem:[#allocation3 + $0x8e8] sm:$0xff]
    %v342 = vld [vmem:[#allocation3 + $0x8f0] sm:$0xff]
    %v343 = vld [vmem:[#allocation3 + $0x8f8] sm:$0xff]
    %v344 = vld [vmem:[#allocation3 + $0x900] sm:$0xff]
    %v345 = vld [vmem:[#allocation3 + $0x908] sm:$0xff]
    %v346 = vld [vmem:[#allocation3 + $0x910] sm:$0xff]
    %v347 = vld [vmem:[#allocation3 + $0x918] sm:$0xff]
    %v348 = vld [vmem:[#allocation3 + $0x920] sm:$0xff]
    %v349 = vld [vmem:[#allocation3 + $0x928] sm:$0xff]
    %v350 = vld [vmem:[#allocation3 + $0x930] sm:$0xff]
    %v351 = vld [vmem:[#allocation3 + $0x938] sm:$0xff]
    %v352 = vld [vmem:[#allocation3 + $0x940] sm:$0xff]
    %v353 = vld [vmem:[#allocation3 + $0x948] sm:$0xff]
    %v354 = vld [vmem:[#allocation3 + $0x950] sm:$0xff]
    %v355 = vld [vmem:[#allocation3 + $0x958] sm:$0xff]
    %v356 = vld [vmem:[#allocation3 + $0x960] sm:$0xff]
    %v357 = vld [vmem:[#allocation3 + $0x968] sm:$0xff]
    %v358 = vld [vmem:[#allocation3 + $0x970] sm:$0xff]
    %v359 = vld [vmem:[#allocation3 + $0x978] sm:$0xff]
    %v360 = vld [vmem:[#allocation3 + $0x980] sm:$0xff]
    %v361 = vld [vmem:[#allocation3 + $0x988] sm:$0xff]
    %v362 = vld [vmem:[#allocation3 + $0x990] sm:$0xff]
    %v363 = vld [vmem:[#allocation3 + $0x998] sm:$0xff]
    %v364 = vld [vmem:[#allocation3 + $0x9a0] sm:$0xff]
    %v365 = vld [vmem:[#allocation3 + $0x9a8] sm:$0xff]
    %v366 = vld [vmem:[#allocation3 + $0x9b0] sm:$0xff]
    %v367 = vld [vmem:[#allocation3 + $0x9b8] sm:$0xff]
    %v368 = vld [vmem:[#allocation3 + $0x9c0] sm:$0xff]
    %v369 = vld [vmem:[#allocation3 + $0x9c8] sm:$0xff]
    %v370 = vld [vmem:[#allocation3 + $0x9d0] sm:$0xff]
    %v371 = vld [vmem:[#allocation3 + $0x9d8] sm:$0xff]
    %v372 = vld [vmem:[#allocation3 + $0x9e0] sm:$0xff]
    %v373 = vld [vmem:[#allocation3 + $0x9e8] sm:$0xff]
    %v374 = vld [vmem:[#allocation3 + $0x9f0] sm:$0xff]
    %v375 = vld [vmem:[#allocation3 + $0x9f8] sm:$0xff]
    %v378 = vunpack.c.l.s4 1983009808
    %v379 = vunpack.c.0.s8 %v378
    %v380 = vlaneseq
    %v381 = vshrl.u32 %v380, 7
    %v382 = vsub.s32 %v379, %v381
    %v383 = vrot.slane %v55, %v382
    %v384 = vcombine.high %v383, %v383
    %387 = vmatprep.subr.mxu0 %v57
    %388 = vmatpush1.msra.mxu0 %v56
    %389 = vmatprep.subr.mxu0 %v67
    %390 = vmatpush1.msra.mxu0 %v66
    %391 = vmatprep.subr.mxu0 %v77
    %392 = vmatpush1.msra.mxu0 %v76
    %393 = vmatprep.subr.mxu0 %v87
    %394 = vmatpush1.msra.mxu0 %v86
    %395 = vmatprep.subr.mxu0 %v97
    %396 = vmatpush1.msra.mxu0 %v96
    %397 = vmatprep.subr.mxu0 %v107
    %398 = vmatpush1.msra.mxu0 %v106
    %399 = vmatprep.subr.mxu0 %v117
    %400 = vmatpush1.msra.mxu0 %v116
    %401 = vmatprep.subr.mxu0 %v127
    %402 = vmatpush1.msra.mxu0 %v126
    %403 = vmatprep.subr.mxu0 %v137
    %404 = vmatpush1.msra.mxu0 %v136
    %405 = vmatprep.subr.mxu0 %v147
    %406 = vmatpush1.msra.mxu0 %v146
    %407 = vmatprep.subr.mxu0 %v157
    %408 = vmatpush1.msra.mxu0 %v156
    %409 = vmatprep.subr.mxu0 %v167
    %410 = vmatpush1.msra.mxu0 %v166
    %411 = vmatprep.subr.mxu0 %v177
    %412 = vmatpush1.msra.mxu0 %v176
    %413 = vmatprep.subr.mxu0 %v187
    %414 = vmatpush1.msra.mxu0 %v186
    %415 = vmatprep.subr.mxu0 %v197
    %416 = vmatpush1.msra.mxu0 %v196
    %417 = vmatprep.subr.mxu0 %v207
    %418 = vmatpush1.msra.mxu0 %v206
    %419 = vmatprep.subr.mxu0 %v217
    %420 = vmatpush1.msra.mxu0 %v216
    %421 = vmatprep.subr.mxu0 %v227
    %422 = vmatpush1.msra.mxu0 %v226
    %423 = vmatprep.subr.mxu0 %v237
    %424 = vmatpush1.msra.mxu0 %v236
    %425 = vmatprep.subr.mxu0 %v247
    %426 = vmatpush1.msra.mxu0 %v246
    %427 = vmatprep.subr.mxu0 %v257
    %428 = vmatpush1.msra.mxu0 %v256
    %429 = vmatprep.subr.mxu0 %v267
    %430 = vmatpush1.msra.mxu0 %v266
    %431 = vmatprep.subr.mxu0 %v277
    %432 = vmatpush1.msra.mxu0 %v276
    %433 = vmatprep.subr.mxu0 %v287
    %434 = vmatpush1.msra.mxu0 %v286
    %435 = vmatprep.subr.mxu0 %v297
    %436 = vmatpush1.msra.mxu0 %v296
    %437 = vmatprep.subr.mxu0 %v307
    %438 = vmatpush1.msra.mxu0 %v306
    %439 = vmatprep.subr.mxu0 %v317
    %440 = vmatpush1.msra.mxu0 %v316
    %441 = vmatprep.subr.mxu0 %v327
    %442 = vmatpush1.msra.mxu0 %v326
    %443 = vmatprep.subr.mxu0 %v337
    %444 = vmatpush1.msra.mxu0 %v336
    %445 = vmatprep.subr.mxu0 %v347
    %446 = vmatpush1.msra.mxu0 %v346
    %447 = vmatprep.subr.mxu0 %v357
    %448 = vmatpush1.msra.mxu0 %v356
    %449 = vmatprep.subr.mxu0 %v367
    %450 = vmatpush1.msra.mxu0 %v366
    %451 = vmatprep.mubr.f32.mxu0 %v384
    %452 = vmatmul.mubr.f32.gmra.mrb[0].mxu0 %v383
    %v453 = vpop.f32.mrb[0].mxu0
    %v454 = vadd.f32 0.0, %v453
    %v455 = vpop.f32.mrb[0].mxu0
    %v456 = vadd.f32 0.0, %v455
    %457 = vdwg.mxu0
    %458 = vmatprep.subr.mxu0 %v59
    %459 = vmatpush1.msra.mxu0 %v58
    %460 = vmatprep.subr.mxu0 %v69
    %461 = vmatpush1.msra.mxu0 %v68
    %462 = vmatprep.subr.mxu0 %v79
    %463 = vmatpush1.msra.mxu0 %v78
    %464 = vmatprep.subr.mxu0 %v89
    %465 = vmatpush1.msra.mxu0 %v88
    %466 = vmatprep.subr.mxu0 %v99
    %467 = vmatpush1.msra.mxu0 %v98
    %468 = vmatprep.subr.mxu0 %v109
    %469 = vmatpush1.msra.mxu0 %v108
    %470 = vmatprep.subr.mxu0 %v119
    %471 = vmatpush1.msra.mxu0 %v118
    %472 = vmatprep.subr.mxu0 %v129
    %473 = vmatpush1.msra.mxu0 %v128
    %474 = vmatprep.subr.mxu0 %v139
    %475 = vmatpush1.msra.mxu0 %v138
    %476 = vmatprep.subr.mxu0 %v149
    %477 = vmatpush1.msra.mxu0 %v148
    %478 = vmatprep.subr.mxu0 %v159
    %479 = vmatpush1.msra.mxu0 %v158
    %480 = vmatprep.subr.mxu0 %v169
    %481 = vmatpush1.msra.mxu0 %v168
    %482 = vmatprep.subr.mxu0 %v179
    %483 = vmatpush1.msra.mxu0 %v178
    %484 = vmatprep.subr.mxu0 %v189
    %485 = vmatpush1.msra.mxu0 %v188
    %486 = vmatprep.subr.mxu0 %v199
    %487 = vmatpush1.msra.mxu0 %v198
    %488 = vmatprep.subr.mxu0 %v209
    %489 = vmatpush1.msra.mxu0 %v208
    %490 = vmatprep.subr.mxu0 %v219
    %491 = vmatpush1.msra.mxu0 %v218
    %492 = vmatprep.subr.mxu0 %v229
    %493 = vmatpush1.msra.mxu0 %v228
    %494 = vmatprep.subr.mxu0 %v239
    %495 = vmatpush1.msra.mxu0 %v238
    %496 = vmatprep.subr.mxu0 %v249
    %497 = vmatpush1.msra.mxu0 %v248
    %498 = vmatprep.subr.mxu0 %v259
    %499 = vmatpush1.msra.mxu0 %v258
    %500 = vmatprep.subr.mxu0 %v269
    %501 = vmatpush1.msra.mxu0 %v268
    %502 = vmatprep.subr.mxu0 %v279
    %503 = vmatpush1.msra.mxu0 %v278
    %504 = vmatprep.subr.mxu0 %v289
    %505 = vmatpush1.msra.mxu0 %v288
    %506 = vmatprep.subr.mxu0 %v299
    %507 = vmatpush1.msra.mxu0 %v298
    %508 = vmatprep.subr.mxu0 %v309
    %509 = vmatpush1.msra.mxu0 %v308
    %510 = vmatprep.subr.mxu0 %v319
    %511 = vmatpush1.msra.mxu0 %v318
    %512 = vmatprep.subr.mxu0 %v329
    %513 = vmatpush1.msra.mxu0 %v328
    %514 = vmatprep.subr.mxu0 %v339
    %515 = vmatpush1.msra.mxu0 %v338
    %516 = vmatprep.subr.mxu0 %v349
    %517 = vmatpush1.msra.mxu0 %v348
    %518 = vmatprep.subr.mxu0 %v359
    %519 = vmatpush1.msra.mxu0 %v358
    %520 = vmatprep.subr.mxu0 %v369
    %521 = vmatpush1.msra.mxu0 %v368
    %522 = vmatprep.mubr.f32.mxu0 %v384
    %523 = vmatmul.mubr.f32.gmra.mrb[0].mxu0 %v383
    %v524 = vpop.f32.mrb[0].mxu0
    %v525 = vadd.f32 0.0, %v524
    %v526 = vpop.f32.mrb[0].mxu0
    %v527 = vadd.f32 0.0, %v526
    %528 = vdwg.mxu0
    %529 = vmatprep.subr.mxu0 %v61
    %530 = vmatpush1.msra.mxu0 %v60
    %531 = vmatprep.subr.mxu0 %v71
    %532 = vmatpush1.msra.mxu0 %v70
    %533 = vmatprep.subr.mxu0 %v81
    %534 = vmatpush1.msra.mxu0 %v80
    %535 = vmatprep.subr.mxu0 %v91
    %536 = vmatpush1.msra.mxu0 %v90
    %537 = vmatprep.subr.mxu0 %v101
    %538 = vmatpush1.msra.mxu0 %v100
    %539 = vmatprep.subr.mxu0 %v111
    %540 = vmatpush1.msra.mxu0 %v110
    %541 = vmatprep.subr.mxu0 %v121
    %542 = vmatpush1.msra.mxu0 %v120
    %543 = vmatprep.subr.mxu0 %v131
    %544 = vmatpush1.msra.mxu0 %v130
    %545 = vmatprep.subr.mxu0 %v141
    %546 = vmatpush1.msra.mxu0 %v140
    %547 = vmatprep.subr.mxu0 %v151
    %548 = vmatpush1.msra.mxu0 %v150
    %549 = vmatprep.subr.mxu0 %v161
    %550 = vmatpush1.msra.mxu0 %v160
    %551 = vmatprep.subr.mxu0 %v171
    %552 = vmatpush1.msra.mxu0 %v170
    %553 = vmatprep.subr.mxu0 %v181
    %554 = vmatpush1.msra.mxu0 %v180
    %555 = vmatprep.subr.mxu0 %v191
    %556 = vmatpush1.msra.mxu0 %v190
    %557 = vmatprep.subr.mxu0 %v201
    %558 = vmatpush1.msra.mxu0 %v200
    %559 = vmatprep.subr.mxu0 %v211
    %560 = vmatpush1.msra.mxu0 %v210
    %561 = vmatprep.subr.mxu0 %v221
    %562 = vmatpush1.msra.mxu0 %v220
    %563 = vmatprep.subr.mxu0 %v231
    %564 = vmatpush1.msra.mxu0 %v230
    %565 = vmatprep.subr.mxu0 %v241
    %566 = vmatpush1.msra.mxu0 %v240
    %567 = vmatprep.subr.mxu0 %v251
    %568 = vmatpush1.msra.mxu0 %v250
    %569 = vmatprep.subr.mxu0 %v261
    %570 = vmatpush1.msra.mxu0 %v260
    %571 = vmatprep.subr.mxu0 %v271
    %572 = vmatpush1.msra.mxu0 %v270
    %573 = vmatprep.subr.mxu0 %v281
    %574 = vmatpush1.msra.mxu0 %v280
    %575 = vmatprep.subr.mxu0 %v291
    %576 = vmatpush1.msra.mxu0 %v290
    %577 = vmatprep.subr.mxu0 %v301
    %578 = vmatpush1.msra.mxu0 %v300
    %579 = vmatprep.subr.mxu0 %v311
    %580 = vmatpush1.msra.mxu0 %v310
    %581 = vmatprep.subr.mxu0 %v321
    %582 = vmatpush1.msra.mxu0 %v320
    %583 = vmatprep.subr.mxu0 %v331
    %584 = vmatpush1.msra.mxu0 %v330
    %585 = vmatprep.subr.mxu0 %v341
    %586 = vmatpush1.msra.mxu0 %v340
    %587 = vmatprep.subr.mxu0 %v351
    %588 = vmatpush1.msra.mxu0 %v350
    %589 = vmatprep.subr.mxu0 %v361
    %590 = vmatpush1.msra.mxu0 %v360
    %591 = vmatprep.subr.mxu0 %v371
    %592 = vmatpush1.msra.mxu0 %v370
    %593 = vmatprep.mubr.f32.mxu0 %v384
    %594 = vmatmul.mubr.f32.gmra.mrb[0].mxu0 %v383
    %v595 = vpop.f32.mrb[0].mxu0
    %v596 = vadd.f32 0.0, %v595
    %v597 = vpop.f32.mrb[0].mxu0
    %v598 = vadd.f32 0.0, %v597
    %599 = vdwg.mxu0
    %600 = vmatprep.subr.mxu0 %v63
    %601 = vmatpush1.msra.mxu0 %v62
    %602 = vmatprep.subr.mxu0 %v73
    %603 = vmatpush1.msra.mxu0 %v72
    %604 = vmatprep.subr.mxu0 %v83
    %605 = vmatpush1.msra.mxu0 %v82
    %606 = vmatprep.subr.mxu0 %v93
    %607 = vmatpush1.msra.mxu0 %v92
    %608 = vmatprep.subr.mxu0 %v103
    %609 = vmatpush1.msra.mxu0 %v102
    %610 = vmatprep.subr.mxu0 %v113
    %611 = vmatpush1.msra.mxu0 %v112
    %612 = vmatprep.subr.mxu0 %v123
    %613 = vmatpush1.msra.mxu0 %v122
    %614 = vmatprep.subr.mxu0 %v133
    %615 = vmatpush1.msra.mxu0 %v132
    %616 = vmatprep.subr.mxu0 %v143
    %617 = vmatpush1.msra.mxu0 %v142
    %618 = vmatprep.subr.mxu0 %v153
    %619 = vmatpush1.msra.mxu0 %v152
    %620 = vmatprep.subr.mxu0 %v163
    %621 = vmatpush1.msra.mxu0 %v162
    %622 = vmatprep.subr.mxu0 %v173
    %623 = vmatpush1.msra.mxu0 %v172
    %624 = vmatprep.subr.mxu0 %v183
    %625 = vmatpush1.msra.mxu0 %v182
    %626 = vmatprep.subr.mxu0 %v193
    %627 = vmatpush1.msra.mxu0 %v192
    %628 = vmatprep.subr.mxu0 %v203
    %629 = vmatpush1.msra.mxu0 %v202
    %630 = vmatprep.subr.mxu0 %v213
    %631 = vmatpush1.msra.mxu0 %v212
    %632 = vmatprep.subr.mxu0 %v223
    %633 = vmatpush1.msra.mxu0 %v222
    %634 = vmatprep.subr.mxu0 %v233
    %635 = vmatpush1.msra.mxu0 %v232
    %636 = vmatprep.subr.mxu0 %v243
    %637 = vmatpush1.msra.mxu0 %v242
    %638 = vmatprep.subr.mxu0 %v253
    %639 = vmatpush1.msra.mxu0 %v252
    %640 = vmatprep.subr.mxu0 %v263
    %641 = vmatpush1.msra.mxu0 %v262
    %642 = vmatprep.subr.mxu0 %v273
    %643 = vmatpush1.msra.mxu0 %v272
    %644 = vmatprep.subr.mxu0 %v283
    %645 = vmatpush1.msra.mxu0 %v282
    %646 = vmatprep.subr.mxu0 %v293
    %647 = vmatpush1.msra.mxu0 %v292
    %648 = vmatprep.subr.mxu0 %v303
    %649 = vmatpush1.msra.mxu0 %v302
    %650 = vmatprep.subr.mxu0 %v313
    %651 = vmatpush1.msra.mxu0 %v312
    %652 = vmatprep.subr.mxu0 %v323
    %653 = vmatpush1.msra.mxu0 %v322
    %654 = vmatprep.subr.mxu0 %v333
    %655 = vmatpush1.msra.mxu0 %v332
    %656 = vmatprep.subr.mxu0 %v343
    %657 = vmatpush1.msra.mxu0 %v342
    %658 = vmatprep.subr.mxu0 %v353
    %659 = vmatpush1.msra.mxu0 %v352
    %660 = vmatprep.subr.mxu0 %v363
    %661 = vmatpush1.msra.mxu0 %v362
    %662 = vmatprep.subr.mxu0 %v373
    %663 = vmatpush1.msra.mxu0 %v372
    %664 = vmatprep.mubr.f32.mxu0 %v384
    %665 = vmatmul.mubr.f32.gmra.mrb[0].mxu0 %v383
    %v666 = vpop.f32.mrb[0].mxu0
    %v667 = vadd.f32 0.0, %v666
    %v668 = vpop.f32.mrb[0].mxu0
    %v669 = vadd.f32 0.0, %v668
    %670 = vdwg.mxu0
    %671 = vmatprep.subr.mxu0 %v65
    %672 = vmatpush1.msra.mxu0 %v64
    %673 = vmatprep.subr.mxu0 %v75
    %674 = vmatpush1.msra.mxu0 %v74
    %675 = vmatprep.subr.mxu0 %v85
    %676 = vmatpush1.msra.mxu0 %v84
    %677 = vmatprep.subr.mxu0 %v95
    %678 = vmatpush1.msra.mxu0 %v94
    %679 = vmatprep.subr.mxu0 %v105
    %680 = vmatpush1.msra.mxu0 %v104
    %681 = vmatprep.subr.mxu0 %v115
    %682 = vmatpush1.msra.mxu0 %v114
    %683 = vmatprep.subr.mxu0 %v125
    %684 = vmatpush1.msra.mxu0 %v124
    %685 = vmatprep.subr.mxu0 %v135
    %686 = vmatpush1.msra.mxu0 %v134
    %687 = vmatprep.subr.mxu0 %v145
    %688 = vmatpush1.msra.mxu0 %v144
    %689 = vmatprep.subr.mxu0 %v155
    %690 = vmatpush1.msra.mxu0 %v154
    %691 = vmatprep.subr.mxu0 %v165
    %692 = vmatpush1.msra.mxu0 %v164
    %693 = vmatprep.subr.mxu0 %v175
    %694 = vmatpush1.msra.mxu0 %v174
    %695 = vmatprep.subr.mxu0 %v185
    %696 = vmatpush1.msra.mxu0 %v184
    %697 = vmatprep.subr.mxu0 %v195
    %698 = vmatpush1.msra.mxu0 %v194
    %699 = vmatprep.subr.mxu0 %v205
    %700 = vmatpush1.msra.mxu0 %v204
    %701 = vmatprep.subr.mxu0 %v215
    %702 = vmatpush1.msra.mxu0 %v214
    %703 = vmatprep.subr.mxu0 %v225
    %704 = vmatpush1.msra.mxu0 %v224
    %705 = vmatprep.subr.mxu0 %v235
    %706 = vmatpush1.msra.mxu0 %v234
    %707 = vmatprep.subr.mxu0 %v245
    %708 = vmatpush1.msra.mxu0 %v244
    %709 = vmatprep.subr.mxu0 %v255
    %710 = vmatpush1.msra.mxu0 %v254
    %711 = vmatprep.subr.mxu0 %v265
    %712 = vmatpush1.msra.mxu0 %v264
    %713 = vmatprep.subr.mxu0 %v275
    %714 = vmatpush1.msra.mxu0 %v274
    %715 = vmatprep.subr.mxu0 %v285
    %716 = vmatpush1.msra.mxu0 %v284
    %717 = vmatprep.subr.mxu0 %v295
    %718 = vmatpush1.msra.mxu0 %v294
    %719 = vmatprep.subr.mxu0 %v305
    %720 = vmatpush1.msra.mxu0 %v304
    %721 = vmatprep.subr.mxu0 %v315
    %722 = vmatpush1.msra.mxu0 %v314
    %723 = vmatprep.subr.mxu0 %v325
    %724 = vmatpush1.msra.mxu0 %v324
    %725 = vmatprep.subr.mxu0 %v335
    %726 = vmatpush1.msra.mxu0 %v334
    %727 = vmatprep.subr.mxu0 %v345
    %728 = vmatpush1.msra.mxu0 %v344
    %729 = vmatprep.subr.mxu0 %v355
    %730 = vmatpush1.msra.mxu0 %v354
    %731 = vmatprep.subr.mxu0 %v365
    %732 = vmatpush1.msra.mxu0 %v364
    %733 = vmatprep.subr.mxu0 %v375
    %734 = vmatpush1.msra.mxu0 %v374
    %735 = vmatprep.mubr.f32.mxu0 %v384
    %736 = vmatmul.mubr.f32.gmra.mrb[0].mxu0 %v383
    %v737 = vpop.f32.mrb[0].mxu0
    %v738 = vadd.f32 0.0, %v737
    %v739 = vpop.f32.mrb[0].mxu0
    %v740 = vadd.f32 0.0, %v739
    %741 = vdwg.mxu0
    %v742 = vld [vmem:[#allocation5] sm:$0xff]
    %v743 = vld [vmem:[#allocation5 + $0x8] sm:$0xff]
    %v744 = vld [vmem:[#allocation5 + $0x10] sm:$0xff]
    %v745 = vld [vmem:[#allocation5 + $0x18] sm:$0xff]
    %v746 = vld [vmem:[#allocation5 + $0x20] sm:$0xff]
    %v747 = vld [vmem:[#allocation5 + $0x28] sm:$0xff]
    %v748 = vld [vmem:[#allocation5 + $0x30] sm:$0xff]
    %v749 = vld [vmem:[#allocation5 + $0x38] sm:$0xff]
    %v750 = vld [vmem:[#allocation5 + $0x40] sm:$0xff]
    %v751 = vld [vmem:[#allocation5 + $0x48] sm:$0xff]
    %v752 = vld [vmem:[#allocation5 + $0x50] sm:$0xff]
    %v753 = vld [vmem:[#allocation5 + $0x58] sm:$0xff]
    %v754 = vld [vmem:[#allocation5 + $0x60] sm:$0xff]
    %v755 = vld [vmem:[#allocation5 + $0x68] sm:$0xff]
    %v756 = vld [vmem:[#allocation5 + $0x70] sm:$0xff]
    %v757 = vld [vmem:[#allocation5 + $0x78] sm:$0xff]
    %v758 = vlaneseq
    %v759 = vand.u32 %v758, 127
    %v760 = vld [vmem:[#allocation2] sm:$0x3]
    %762 = vset.pattern.permute.xlu0 0
    %763 = vperm.xlu0 %762, %v760
    %v764 = vpop.permute.xlu0 %763
    %766 = vmatprep.subr.mxu0 0.0
    %767 = vmatpush1.msra.mxu0 %v742
    %768 = vmatprep.subr.mxu0 0.0
    %769 = vmatpush1.msra.mxu0 %v743
    %770 = vmatprep.subr.mxu0 0.0
    %771 = vmatpush1.msra.mxu0 %v744
    %772 = vmatprep.subr.mxu0 0.0
    %773 = vmatpush1.msra.mxu0 %v745
    %774 = vmatprep.subr.mxu0 0.0
    %775 = vmatpush1.msra.mxu0 %v746
    %776 = vmatprep.subr.mxu0 0.0
    %777 = vmatpush1.msra.mxu0 %v747
    %778 = vmatprep.subr.mxu0 0.0
    %779 = vmatpush1.msra.mxu0 %v748
    %780 = vmatprep.subr.mxu0 0.0
    %781 = vmatpush1.msra.mxu0 %v749
    %782 = vmatprep.subr.mxu0 0.0
    %783 = vmatpush1.msra.mxu0 %v750
    %784 = vmatprep.subr.mxu0 0.0
    %785 = vmatpush1.msra.mxu0 %v751
    %786 = vmatprep.subr.mxu0 0.0
    %787 = vmatpush1.msra.mxu0 %v752
    %788 = vmatprep.subr.mxu0 0.0
    %789 = vmatpush1.msra.mxu0 %v753
    %790 = vmatprep.subr.mxu0 0.0
    %791 = vmatpush1.msra.mxu0 %v754
    %792 = vmatprep.subr.mxu0 0.0
    %793 = vmatpush1.msra.mxu0 %v755
    %794 = vmatprep.subr.mxu0 0.0
    %795 = vmatpush1.msra.mxu0 %v756
    %796 = vmatprep.subr.mxu0 0.0
    %797 = vmatpush1.msra.mxu0 %v757
    %798 = vmatprep.subr.mxu0 0.0
    %799 = vmatpush1.msra.mxu0 0.0
    %800 = vmatprep.subr.mxu0 0.0
    %801 = vmatpush1.msra.mxu0 0.0
    %802 = vmatprep.subr.mxu0 0.0
    %803 = vmatpush1.msra.mxu0 0.0
    %804 = vmatprep.subr.mxu0 0.0
    %805 = vmatpush1.msra.mxu0 0.0
    %806 = vmatprep.subr.mxu0 0.0
    %807 = vmatpush1.msra.mxu0 0.0
    %808 = vmatprep.subr.mxu0 0.0
    %809 = vmatpush1.msra.mxu0 0.0
    %810 = vmatprep.subr.mxu0 0.0
    %811 = vmatpush1.msra.mxu0 0.0
    %812 = vmatprep.subr.mxu0 0.0
    %813 = vmatpush1.msra.mxu0 0.0
    %814 = vmatprep.subr.mxu0 0.0
    %815 = vmatpush1.msra.mxu0 0.0
    %816 = vmatprep.subr.mxu0 0.0
    %817 = vmatpush1.msra.mxu0 0.0
    %818 = vmatprep.subr.mxu0 0.0
    %819 = vmatpush1.msra.mxu0 0.0
    %820 = vmatprep.subr.mxu0 0.0
    %821 = vmatpush1.msra.mxu0 0.0
    %822 = vmatprep.subr.mxu0 0.0
    %823 = vmatpush1.msra.mxu0 0.0
    %824 = vmatprep.subr.mxu0 0.0
    %825 = vmatpush1.msra.mxu0 0.0
    %826 = vmatprep.subr.mxu0 0.0
    %827 = vmatpush1.msra.mxu0 0.0
    %828 = vmatprep.subr.mxu0 0.0
    %829 = vmatpush1.msra.mxu0 0.0
    %830 = vmatprep.mubr.f32.mxu0 0.0
    %831 = vmatmul.mubr.f32.gmra.mrb[0].mxu0 %v454
    %v832 = vpop.f32.mrb[0].mxu0
    %v833 = vadd.f32 %v764, %v832
    %v834 = vpop.f32.mrb[0].mxu0
    %835 = vdwg.mxu0
    %v836 = vsub.f32 %v833, %v454
    %v837 = vfloor.f32 %v833
    %v838 = vfloor.f32 %v836
    %vm839 = vcmp.eq.s32.totalorder %v759, 0
    %s840 = scalar_select %p42, 1, 0
    %v841 = vstv %s840
    %vm842 = vcmp.eq.s32.totalorder %v841, 1
    %vm843 = vmand %vm839, %vm842
    %v844 = vsel %vm843, 1, 0
    %vm845 = vcmp.eq.s32.totalorder %v844, 1
    %v846 = vsel %vm845, -1.0, %v838
    %vm847 = vcmp.gt.f32.partialorder %v837, %v846
    %v848 = vsel %vm847, 1, 0
    %v849 = vcvt.s32.f32 %v848
    %850 = vst [vmem:[%s3] sm:$0x3] %v849
    %vm851 = vcmp.eq.s32.totalorder %v759, 127
    %v852 = vsel %vm851, 1, 0
    %vm853 = vcmp.eq.s32.totalorder %v852, 1
    %v854 = vsel %vm853, %v833, 0.0
    %vm855 = vcmask 1041408
    %v856 = vsel %vm855, %v854, 0.0
    %857 = vadd.xlane.f32.xlu0 %v856
    %v858 = vpop.xlane.xlu0 %857
    %859 = vmatprep.subr.mxu0 0.0
    %860 = vmatpush1.msra.mxu0 %v742
    %861 = vmatprep.subr.mxu0 0.0
    %862 = vmatpush1.msra.mxu0 %v743
    %863 = vmatprep.subr.mxu0 0.0
    %864 = vmatpush1.msra.mxu0 %v744
    %865 = vmatprep.subr.mxu0 0.0
    %866 = vmatpush1.msra.mxu0 %v745
    %867 = vmatprep.subr.mxu0 0.0
    %868 = vmatpush1.msra.mxu0 %v746
    %869 = vmatprep.subr.mxu0 0.0
    %870 = vmatpush1.msra.mxu0 %v747
    %871 = vmatprep.subr.mxu0 0.0
    %872 = vmatpush1.msra.mxu0 %v748
    %873 = vmatprep.subr.mxu0 0.0
    %874 = vmatpush1.msra.mxu0 %v749
    %875 = vmatprep.subr.mxu0 0.0
    %876 = vmatpush1.msra.mxu0 %v750
    %877 = vmatprep.subr.mxu0 0.0
    %878 = vmatpush1.msra.mxu0 %v751
    %879 = vmatprep.subr.mxu0 0.0
    %880 = vmatpush1.msra.mxu0 %v752
    %881 = vmatprep.subr.mxu0 0.0
    %882 = vmatpush1.msra.mxu0 %v753
    %883 = vmatprep.subr.mxu0 0.0
    %884 = vmatpush1.msra.mxu0 %v754
    %885 = vmatprep.subr.mxu0 0.0
    %886 = vmatpush1.msra.mxu0 %v755
    %887 = vmatprep.subr.mxu0 0.0
    %888 = vmatpush1.msra.mxu0 %v756
    %889 = vmatprep.subr.mxu0 0.0
    %890 = vmatpush1.msra.mxu0 %v757
    %891 = vmatprep.subr.mxu0 0.0
    %892 = vmatpush1.msra.mxu0 0.0
    %893 = vmatprep.subr.mxu0 0.0
    %894 = vmatpush1.msra.mxu0 0.0
    %895 = vmatprep.subr.mxu0 0.0
    %896 = vmatpush1.msra.mxu0 0.0
    %897 = vmatprep.subr.mxu0 0.0
    %898 = vmatpush1.msra.mxu0 0.0
    %899 = vmatprep.subr.mxu0 0.0
    %900 = vmatpush1.msra.mxu0 0.0
    %901 = vmatprep.subr.mxu0 0.0
    %902 = vmatpush1.msra.mxu0 0.0
    %903 = vmatprep.subr.mxu0 0.0
    %904 = vmatpush1.msra.mxu0 0.0
    %905 = vmatprep.subr.mxu0 0.0
    %906 = vmatpush1.msra.mxu0 0.0
    %907 = vmatprep.subr.mxu0 0.0
    %908 = vmatpush1.msra.mxu0 0.0
    %909 = vmatprep.subr.mxu0 0.0
    %910 = vmatpush1.msra.mxu0 0.0
    %911 = vmatprep.subr.mxu0 0.0
    %912 = vmatpush1.msra.mxu0 0.0
    %913 = vmatprep.subr.mxu0 0.0
    %914 = vmatpush1.msra.mxu0 0.0
    %915 = vmatprep.subr.mxu0 0.0
    %916 = vmatpush1.msra.mxu0 0.0
    %917 = vmatprep.subr.mxu0 0.0
    %918 = vmatpush1.msra.mxu0 0.0
    %919 = vmatprep.subr.mxu0 0.0
    %920 = vmatpush1.msra.mxu0 0.0
    %921 = vmatprep.subr.mxu0 0.0
    %922 = vmatpush1.msra.mxu0 0.0
    %923 = vmatprep.mubr.f32.mxu0 0.0
    %924 = vmatmul.mubr.f32.gmra.mrb[0].mxu0 %v456
    %v925 = vpop.f32.mrb[0].mxu0
    %v926 = vadd.f32 %v858, %v925
    %v927 = vpop.f32.mrb[0].mxu0
    %928 = vdwg.mxu0
    %v929 = vsub.f32 %v926, %v456
    %v930 = vfloor.f32 %v926
    %v931 = vfloor.f32 %v929
    %vm932 = vcmp.gt.f32.partialorder %v930, %v931
    %v933 = vsel %vm932, 1, 0
    %v934 = vcvt.s32.f32 %v933
    %935 = vst [vmem:[%s3 + $0x2] sm:$0x3] %v934
    %v936 = vsel %vm853, %v926, 0.0
    %v937 = vsel %vm855, %v936, 0.0
    %938 = vadd.xlane.f32.xlu0 %v937
    %v939 = vpop.xlane.xlu0 %938
    %940 = vmatprep.subr.mxu0 0.0
    %941 = vmatpush1.msra.mxu0 %v742
    %942 = vmatprep.subr.mxu0 0.0
    %943 = vmatpush1.msra.mxu0 %v743
    %944 = vmatprep.subr.mxu0 0.0
    %945 = vmatpush1.msra.mxu0 %v744
    %946 = vmatprep.subr.mxu0 0.0
    %947 = vmatpush1.msra.mxu0 %v745
    %948 = vmatprep.subr.mxu0 0.0
    %949 = vmatpush1.msra.mxu0 %v746
    %950 = vmatprep.subr.mxu0 0.0
    %951 = vmatpush1.msra.mxu0 %v747
    %952 = vmatprep.subr.mxu0 0.0
    %953 = vmatpush1.msra.mxu0 %v748
    %954 = vmatprep.subr.mxu0 0.0
    %955 = vmatpush1.msra.mxu0 %v749
    %956 = vmatprep.subr.mxu0 0.0
    %957 = vmatpush1.msra.mxu0 %v750
    %958 = vmatprep.subr.mxu0 0.0
    %959 = vmatpush1.msra.mxu0 %v751
    %960 = vmatprep.subr.mxu0 0.0
    %961 = vmatpush1.msra.mxu0 %v752
    %962 = vmatprep.subr.mxu0 0.0
    %963 = vmatpush1.msra.mxu0 %v753
    %964 = vmatprep.subr.mxu0 0.0
    %965 = vmatpush1.msra.mxu0 %v754
    %966 = vmatprep.subr.mxu0 0.0
    %967 = vmatpush1.msra.mxu0 %v755
    %968 = vmatprep.subr.mxu0 0.0
    %969 = vmatpush1.msra.mxu0 %v756
    %970 = vmatprep.subr.mxu0 0.0
    %971 = vmatpush1.msra.mxu0 %v757
    %972 = vmatprep.subr.mxu0 0.0
    %973 = vmatpush1.msra.mxu0 0.0
    %974 = vmatprep.subr.mxu0 0.0
    %975 = vmatpush1.msra.mxu0 0.0
    %976 = vmatprep.subr.mxu0 0.0
    %977 = vmatpush1.msra.mxu0 0.0
    %978 = vmatprep.subr.mxu0 0.0
    %979 = vmatpush1.msra.mxu0 0.0
    %980 = vmatprep.subr.mxu0 0.0
    %981 = vmatpush1.msra.mxu0 0.0
    %982 = vmatprep.subr.mxu0 0.0
    %983 = vmatpush1.msra.mxu0 0.0
    %984 = vmatprep.subr.mxu0 0.0
    %985 = vmatpush1.msra.mxu0 0.0
    %986 = vmatprep.subr.mxu0 0.0
    %987 = vmatpush1.msra.mxu0 0.0
    %988 = vmatprep.subr.mxu0 0.0
    %989 = vmatpush1.msra.mxu0 0.0
    %990 = vmatprep.subr.mxu0 0.0
    %991 = vmatpush1.msra.mxu0 0.0
    %992 = vmatprep.subr.mxu0 0.0
    %993 = vmatpush1.msra.mxu0 0.0
    %994 = vmatprep.subr.mxu0 0.0
    %995 = vmatpush1.msra.mxu0 0.0
    %996 = vmatprep.subr.mxu0 0.0
    %997 = vmatpush1.msra.mxu0 0.0
    %998 = vmatprep.subr.mxu0 0.0
    %999 = vmatpush1.msra.mxu0 0.0
    %1000 = vmatprep.subr.mxu0 0.0
    %1001 = vmatpush1.msra.mxu0 0.0
    %1002 = vmatprep.subr.mxu0 0.0
    %1003 = vmatpush1.msra.mxu0 0.0
    %1004 = vmatprep.mubr.f32.mxu0 0.0
    %1005 = vmatmul.mubr.f32.gmra.mrb[0].mxu0 %v525
    %v1006 = vpop.f32.mrb[0].mxu0
    %v1007 = vadd.f32 %v939, %v1006
    %v1008 = vpop.f32.mrb[0].mxu0
    %1009 = vdwg.mxu0
    %v1010 = vsub.f32 %v1007, %v525
    %v1011 = vfloor.f32 %v1007
    %v1012 = vfloor.f32 %v1010
    %vm1013 = vcmp.gt.f32.partialorder %v1011, %v1012
    %v1014 = vsel %vm1013, 1, 0
    %v1015 = vcvt.s32.f32 %v1014
    %1016 = vst [vmem:[%s3 + $0x4] sm:$0x3] %v1015
    %v1017 = vsel %vm853, %v1007, 0.0
    %v1018 = vsel %vm855, %v1017, 0.0
    %1019 = vadd.xlane.f32.xlu0 %v1018
    %v1020 = vpop.xlane.xlu0 %1019
    %1021 = vmatprep.subr.mxu0 0.0
    %1022 = vmatpush1.msra.mxu0 %v742
    %1023 = vmatprep.subr.mxu0 0.0
    %1024 = vmatpush1.msra.mxu0 %v743
    %1025 = vmatprep.subr.mxu0 0.0
    %1026 = vmatpush1.msra.mxu0 %v744
    %1027 = vmatprep.subr.mxu0 0.0
    %1028 = vmatpush1.msra.mxu0 %v745
    %1029 = vmatprep.subr.mxu0 0.0
    %1030 = vmatpush1.msra.mxu0 %v746
    %1031 = vmatprep.subr.mxu0 0.0
    %1032 = vmatpush1.msra.mxu0 %v747
    %1033 = vmatprep.subr.mxu0 0.0
    %1034 = vmatpush1.msra.mxu0 %v748
    %1035 = vmatprep.subr.mxu0 0.0
    %1036 = vmatpush1.msra.mxu0 %v749
    %1037 = vmatprep.subr.mxu0 0.0
    %1038 = vmatpush1.msra.mxu0 %v750
    %1039 = vmatprep.subr.mxu0 0.0
    %1040 = vmatpush1.msra.mxu0 %v751
    %1041 = vmatprep.subr.mxu0 0.0
    %1042 = vmatpush1.msra.mxu0 %v752
    %1043 = vmatprep.subr.mxu0 0.0
    %1044 = vmatpush1.msra.mxu0 %v753
    %1045 = vmatprep.subr.mxu0 0.0
    %1046 = vmatpush1.msra.mxu0 %v754
    %1047 = vmatprep.subr.mxu0 0.0
    %1048 = vmatpush1.msra.mxu0 %v755
    %1049 = vmatprep.subr.mxu0 0.0
    %1050 = vmatpush1.msra.mxu0 %v756
    %1051 = vmatprep.subr.mxu0 0.0
    %1052 = vmatpush1.msra.mxu0 %v757
    %1053 = vmatprep.subr.mxu0 0.0
    %1054 = vmatpush1.msra.mxu0 0.0
    %1055 = vmatprep.subr.mxu0 0.0
    %1056 = vmatpush1.msra.mxu0 0.0
    %1057 = vmatprep.subr.mxu0 0.0
    %1058 = vmatpush1.msra.mxu0 0.0
    %1059 = vmatprep.subr.mxu0 0.0
    %1060 = vmatpush1.msra.mxu0 0.0
    %1061 = vmatprep.subr.mxu0 0.0
    %1062 = vmatpush1.msra.mxu0 0.0
    %1063 = vmatprep.subr.mxu0 0.0
    %1064 = vmatpush1.msra.mxu0 0.0
    %1065 = vmatprep.subr.mxu0 0.0
    %1066 = vmatpush1.msra.mxu0 0.0
    %1067 = vmatprep.subr.mxu0 0.0
    %1068 = vmatpush1.msra.mxu0 0.0
    %1069 = vmatprep.subr.mxu0 0.0
    %1070 = vmatpush1.msra.mxu0 0.0
    %1071 = vmatprep.subr.mxu0 0.0
    %1072 = vmatpush1.msra.mxu0 0.0
    %1073 = vmatprep.subr.mxu0 0.0
    %1074 = vmatpush1.msra.mxu0 0.0
    %1075 = vmatprep.subr.mxu0 0.0
    %1076 = vmatpush1.msra.mxu0 0.0
    %1077 = vmatprep.subr.mxu0 0.0
    %1078 = vmatpush1.msra.mxu0 0.0
    %1079 = vmatprep.subr.mxu0 0.0
    %1080 = vmatpush1.msra.mxu0 0.0
    %1081 = vmatprep.subr.mxu0 0.0
    %1082 = vmatpush1.msra.mxu0 0.0
    %1083 = vmatprep.subr.mxu0 0.0
    %1084 = vmatpush1.msra.mxu0 0.0
    %1085 = vmatprep.mubr.f32.mxu0 0.0
    %1086 = vmatmul.mubr.f32.gmra.mrb[0].mxu0 %v527
    %v1087 = vpop.f32.mrb[0].mxu0
    %v1088 = vadd.f32 %v1020, %v1087
    %v1089 = vpop.f32.mrb[0].mxu0
    %1090 = vdwg.mxu0
    %v1091 = vsub.f32 %v1088, %v527
    %v1092 = vfloor.f32 %v1088
    %v1093 = vfloor.f32 %v1091
    %vm1094 = vcmp.gt.f32.partialorder %v1092, %v1093
    %v1095 = vsel %vm1094, 1, 0
    %v1096 = vcvt.s32.f32 %v1095
    %1097 = vst [vmem:[%s3 + $0x6] sm:$0x3] %v1096
    %v1098 = vsel %vm853, %v1088, 0.0
    %v1099 = vsel %vm855, %v1098, 0.0
    %1100 = vadd.xlane.f32.xlu0 %v1099
    %v1101 = vpop.xlane.xlu0 %1100
    %1102 = vmatprep.subr.mxu0 0.0
    %1103 = vmatpush1.msra.mxu0 %v742
    %1104 = vmatprep.subr.mxu0 0.0
    %1105 = vmatpush1.msra.mxu0 %v743
    %1106 = vmatprep.subr.mxu0 0.0
    %1107 = vmatpush1.msra.mxu0 %v744
    %1108 = vmatprep.subr.mxu0 0.0
    %1109 = vmatpush1.msra.mxu0 %v745
    %1110 = vmatprep.subr.mxu0 0.0
    %1111 = vmatpush1.msra.mxu0 %v746
    %1112 = vmatprep.subr.mxu0 0.0
    %1113 = vmatpush1.msra.mxu0 %v747
    %1114 = vmatprep.subr.mxu0 0.0
    %1115 = vmatpush1.msra.mxu0 %v748
    %1116 = vmatprep.subr.mxu0 0.0
    %1117 = vmatpush1.msra.mxu0 %v749
    %1118 = vmatprep.subr.mxu0 0.0
    %1119 = vmatpush1.msra.mxu0 %v750
    %1120 = vmatprep.subr.mxu0 0.0
    %1121 = vmatpush1.msra.mxu0 %v751
    %1122 = vmatprep.subr.mxu0 0.0
    %1123 = vmatpush1.msra.mxu0 %v752
    %1124 = vmatprep.subr.mxu0 0.0
    %1125 = vmatpush1.msra.mxu0 %v753
    %1126 = vmatprep.subr.mxu0 0.0
    %1127 = vmatpush1.msra.mxu0 %v754
    %1128 = vmatprep.subr.mxu0 0.0
    %1129 = vmatpush1.msra.mxu0 %v755
    %1130 = vmatprep.subr.mxu0 0.0
    %1131 = vmatpush1.msra.mxu0 %v756
    %1132 = vmatprep.subr.mxu0 0.0
    %1133 = vmatpush1.msra.mxu0 %v757
    %1134 = vmatprep.subr.mxu0 0.0
    %1135 = vmatpush1.msra.mxu0 0.0
    %1136 = vmatprep.subr.mxu0 0.0
    %1137 = vmatpush1.msra.mxu0 0.0
    %1138 = vmatprep.subr.mxu0 0.0
    %1139 = vmatpush1.msra.mxu0 0.0
    %1140 = vmatprep.subr.mxu0 0.0
    %1141 = vmatpush1.msra.mxu0 0.0
    %1142 = vmatprep.subr.mxu0 0.0
    %1143 = vmatpush1.msra.mxu0 0.0
    %1144 = vmatprep.subr.mxu0 0.0
    %1145 = vmatpush1.msra.mxu0 0.0
    %1146 = vmatprep.subr.mxu0 0.0
    %1147 = vmatpush1.msra.mxu0 0.0
    %1148 = vmatprep.subr.mxu0 0.0
    %1149 = vmatpush1.msra.mxu0 0.0
    %1150 = vmatprep.subr.mxu0 0.0
    %1151 = vmatpush1.msra.mxu0 0.0
    %1152 = vmatprep.subr.mxu0 0.0
    %1153 = vmatpush1.msra.mxu0 0.0
    %1154 = vmatprep.subr.mxu0 0.0
    %1155 = vmatpush1.msra.mxu0 0.0
    %1156 = vmatprep.subr.mxu0 0.0
    %1157 = vmatpush1.msra.mxu0 0.0
    %1158 = vmatprep.subr.mxu0 0.0
    %1159 = vmatpush1.msra.mxu0 0.0
    %1160 = vmatprep.subr.mxu0 0.0
    %1161 = vmatpush1.msra.mxu0 0.0
    %1162 = vmatprep.subr.mxu0 0.0
    %1163 = vmatpush1.msra.mxu0 0.0
    %1164 = vmatprep.subr.mxu0 0.0
    %1165 = vmatpush1.msra.mxu0 0.0
    %1166 = vmatprep.mubr.f32.mxu0 0.0
    %1167 = vmatmul.mubr.f32.gmra.mrb[0].mxu0 %v596
    %v1168 = vpop.f32.mrb[0].mxu0
    %v1169 = vadd.f32 %v1101, %v1168
    %v1170 = vpop.f32.mrb[0].mxu0
    %1171 = vdwg.mxu0
    %v1172 = vsub.f32 %v1169, %v596
    %v1173 = vfloor.f32 %v1169
    %v1174 = vfloor.f32 %v1172
    %vm1175 = vcmp.gt.f32.partialorder %v1173, %v1174
    %v1176 = vsel %vm1175, 1, 0
    %v1177 = vcvt.s32.f32 %v1176
    %1178 = vst [vmem:[%s3 + $0x8] sm:$0x3] %v1177
    %v1179 = vsel %vm853, %v1169, 0.0
    %v1180 = vsel %vm855, %v1179, 0.0
    %1181 = vadd.xlane.f32.xlu0 %v1180
    %v1182 = vpop.xlane.xlu0 %1181
    %1183 = vmatprep.subr.mxu0 0.0
    %1184 = vmatpush1.msra.mxu0 %v742
    %1185 = vmatprep.subr.mxu0 0.0
    %1186 = vmatpush1.msra.mxu0 %v743
    %1187 = vmatprep.subr.mxu0 0.0
    %1188 = vmatpush1.msra.mxu0 %v744
    %1189 = vmatprep.subr.mxu0 0.0
    %1190 = vmatpush1.msra.mxu0 %v745
    %1191 = vmatprep.subr.mxu0 0.0
    %1192 = vmatpush1.msra.mxu0 %v746
    %1193 = vmatprep.subr.mxu0 0.0
    %1194 = vmatpush1.msra.mxu0 %v747
    %1195 = vmatprep.subr.mxu0 0.0
    %1196 = vmatpush1.msra.mxu0 %v748
    %1197 = vmatprep.subr.mxu0 0.0
    %1198 = vmatpush1.msra.mxu0 %v749
    %1199 = vmatprep.subr.mxu0 0.0
    %1200 = vmatpush1.msra.mxu0 %v750
    %1201 = vmatprep.subr.mxu0 0.0
    %1202 = vmatpush1.msra.mxu0 %v751
    %1203 = vmatprep.subr.mxu0 0.0
    %1204 = vmatpush1.msra.mxu0 %v752
    %1205 = vmatprep.subr.mxu0 0.0
    %1206 = vmatpush1.msra.mxu0 %v753
    %1207 = vmatprep.subr.mxu0 0.0
    %1208 = vmatpush1.msra.mxu0 %v754
    %1209 = vmatprep.subr.mxu0 0.0
    %1210 = vmatpush1.msra.mxu0 %v755
    %1211 = vmatprep.subr.mxu0 0.0
    %1212 = vmatpush1.msra.mxu0 %v756
    %1213 = vmatprep.subr.mxu0 0.0
    %1214 = vmatpush1.msra.mxu0 %v757
    %1215 = vmatprep.subr.mxu0 0.0
    %1216 = vmatpush1.msra.mxu0 0.0
    %1217 = vmatprep.subr.mxu0 0.0
    %1218 = vmatpush1.msra.mxu0 0.0
    %1219 = vmatprep.subr.mxu0 0.0
    %1220 = vmatpush1.msra.mxu0 0.0
    %1221 = vmatprep.subr.mxu0 0.0
    %1222 = vmatpush1.msra.mxu0 0.0
    %1223 = vmatprep.subr.mxu0 0.0
    %1224 = vmatpush1.msra.mxu0 0.0
    %1225 = vmatprep.subr.mxu0 0.0
    %1226 = vmatpush1.msra.mxu0 0.0
    %1227 = vmatprep.subr.mxu0 0.0
    %1228 = vmatpush1.msra.mxu0 0.0
    %1229 = vmatprep.subr.mxu0 0.0
    %1230 = vmatpush1.msra.mxu0 0.0
    %1231 = vmatprep.subr.mxu0 0.0
    %1232 = vmatpush1.msra.mxu0 0.0
    %1233 = vmatprep.subr.mxu0 0.0
    %1234 = vmatpush1.msra.mxu0 0.0
    %1235 = vmatprep.subr.mxu0 0.0
    %1236 = vmatpush1.msra.mxu0 0.0
    %1237 = vmatprep.subr.mxu0 0.0
    %1238 = vmatpush1.msra.mxu0 0.0
    %1239 = vmatprep.subr.mxu0 0.0
    %1240 = vmatpush1.msra.mxu0 0.0
    %1241 = vmatprep.subr.mxu0 0.0
    %1242 = vmatpush1.msra.mxu0 0.0
    %1243 = vmatprep.subr.mxu0 0.0
    %1244 = vmatpush1.msra.mxu0 0.0
    %1245 = vmatprep.subr.mxu0 0.0
    %1246 = vmatpush1.msra.mxu0 0.0
    %1247 = vmatprep.mubr.f32.mxu0 0.0
    %1248 = vmatmul.mubr.f32.gmra.mrb[0].mxu0 %v598
    %v1249 = vpop.f32.mrb[0].mxu0
    %v1250 = vadd.f32 %v1182, %v1249
    %v1251 = vpop.f32.mrb[0].mxu0
    %1252 = vdwg.mxu0
    %v1253 = vsub.f32 %v1250, %v598
    %v1254 = vfloor.f32 %v1250
    %v1255 = vfloor.f32 %v1253
    %vm1256 = vcmp.gt.f32.partialorder %v1254, %v1255
    %v1257 = vsel %vm1256, 1, 0
    %v1258 = vcvt.s32.f32 %v1257
    %1259 = vst [vmem:[%s3 + $0xa] sm:$0x3] %v1258
    %v1260 = vsel %vm853, %v1250, 0.0
    %v1261 = vsel %vm855, %v1260, 0.0
    %1262 = vadd.xlane.f32.xlu0 %v1261
    %v1263 = vpop.xlane.xlu0 %1262
    %1264 = vmatprep.subr.mxu0 0.0
    %1265 = vmatpush1.msra.mxu0 %v742
    %1266 = vmatprep.subr.mxu0 0.0
    %1267 = vmatpush1.msra.mxu0 %v743
    %1268 = vmatprep.subr.mxu0 0.0
    %1269 = vmatpush1.msra.mxu0 %v744
    %1270 = vmatprep.subr.mxu0 0.0
    %1271 = vmatpush1.msra.mxu0 %v745
    %1272 = vmatprep.subr.mxu0 0.0
    %1273 = vmatpush1.msra.mxu0 %v746
    %1274 = vmatprep.subr.mxu0 0.0
    %1275 = vmatpush1.msra.mxu0 %v747
    %1276 = vmatprep.subr.mxu0 0.0
    %1277 = vmatpush1.msra.mxu0 %v748
    %1278 = vmatprep.subr.mxu0 0.0
    %1279 = vmatpush1.msra.mxu0 %v749
    %1280 = vmatprep.subr.mxu0 0.0
    %1281 = vmatpush1.msra.mxu0 %v750
    %1282 = vmatprep.subr.mxu0 0.0
    %1283 = vmatpush1.msra.mxu0 %v751
    %1284 = vmatprep.subr.mxu0 0.0
    %1285 = vmatpush1.msra.mxu0 %v752
    %1286 = vmatprep.subr.mxu0 0.0
    %1287 = vmatpush1.msra.mxu0 %v753
    %1288 = vmatprep.subr.mxu0 0.0
    %1289 = vmatpush1.msra.mxu0 %v754
    %1290 = vmatprep.subr.mxu0 0.0
    %1291 = vmatpush1.msra.mxu0 %v755
    %1292 = vmatprep.subr.mxu0 0.0
    %1293 = vmatpush1.msra.mxu0 %v756
    %1294 = vmatprep.subr.mxu0 0.0
    %1295 = vmatpush1.msra.mxu0 %v757
    %1296 = vmatprep.subr.mxu0 0.0
    %1297 = vmatpush1.msra.mxu0 0.0
    %1298 = vmatprep.subr.mxu0 0.0
    %1299 = vmatpush1.msra.mxu0 0.0
    %1300 = vmatprep.subr.mxu0 0.0
    %1301 = vmatpush1.msra.mxu0 0.0
    %1302 = vmatprep.subr.mxu0 0.0
    %1303 = vmatpush1.msra.mxu0 0.0
    %1304 = vmatprep.subr.mxu0 0.0
    %1305 = vmatpush1.msra.mxu0 0.0
    %1306 = vmatprep.subr.mxu0 0.0
    %1307 = vmatpush1.msra.mxu0 0.0
    %1308 = vmatprep.subr.mxu0 0.0
    %1309 = vmatpush1.msra.mxu0 0.0
    %1310 = vmatprep.subr.mxu0 0.0
    %1311 = vmatpush1.msra.mxu0 0.0
    %1312 = vmatprep.subr.mxu0 0.0
    %1313 = vmatpush1.msra.mxu0 0.0
    %1314 = vmatprep.subr.mxu0 0.0
    %1315 = vmatpush1.msra.mxu0 0.0
    %1316 = vmatprep.subr.mxu0 0.0
    %1317 = vmatpush1.msra.mxu0 0.0
    %1318 = vmatprep.subr.mxu0 0.0
    %1319 = vmatpush1.msra.mxu0 0.0
    %1320 = vmatprep.subr.mxu0 0.0
    %1321 = vmatpush1.msra.mxu0 0.0
    %1322 = vmatprep.subr.mxu0 0.0
    %1323 = vmatpush1.msra.mxu0 0.0
    %1324 = vmatprep.subr.mxu0 0.0
    %1325 = vmatpush1.msra.mxu0 0.0
    %1326 = vmatprep.subr.mxu0 0.0
    %1327 = vmatpush1.msra.mxu0 0.0
    %1328 = vmatprep.mubr.f32.mxu0 0.0
    %1329 = vmatmul.mubr.f32.gmra.mrb[0].mxu0 %v667
    %v1330 = vpop.f32.mrb[0].mxu0
    %v1331 = vadd.f32 %v1263, %v1330
    %v1332 = vpop.f32.mrb[0].mxu0
    %1333 = vdwg.mxu0
    %v1334 = vsub.f32 %v1331, %v667
    %v1335 = vfloor.f32 %v1331
    %v1336 = vfloor.f32 %v1334
    %vm1337 = vcmp.gt.f32.partialorder %v1335, %v1336
    %v1338 = vsel %vm1337, 1, 0
    %v1339 = vcvt.s32.f32 %v1338
    %1340 = vst [vmem:[%s3 + $0xc] sm:$0x3] %v1339
    %v1341 = vsel %vm853, %v1331, 0.0
    %v1342 = vsel %vm855, %v1341, 0.0
    %1343 = vadd.xlane.f32.xlu0 %v1342
    %v1344 = vpop.xlane.xlu0 %1343
    %1345 = vmatprep.subr.mxu0 0.0
    %1346 = vmatpush1.msra.mxu0 %v742
    %1347 = vmatprep.subr.mxu0 0.0
    %1348 = vmatpush1.msra.mxu0 %v743
    %1349 = vmatprep.subr.mxu0 0.0
    %1350 = vmatpush1.msra.mxu0 %v744
    %1351 = vmatprep.subr.mxu0 0.0
    %1352 = vmatpush1.msra.mxu0 %v745
    %1353 = vmatprep.subr.mxu0 0.0
    %1354 = vmatpush1.msra.mxu0 %v746
    %1355 = vmatprep.subr.mxu0 0.0
    %1356 = vmatpush1.msra.mxu0 %v747
    %1357 = vmatprep.subr.mxu0 0.0
    %1358 = vmatpush1.msra.mxu0 %v748
    %1359 = vmatprep.subr.mxu0 0.0
    %1360 = vmatpush1.msra.mxu0 %v749
    %1361 = vmatprep.subr.mxu0 0.0
    %1362 = vmatpush1.msra.mxu0 %v750
    %1363 = vmatprep.subr.mxu0 0.0
    %1364 = vmatpush1.msra.mxu0 %v751
    %1365 = vmatprep.subr.mxu0 0.0
    %1366 = vmatpush1.msra.mxu0 %v752
    %1367 = vmatprep.subr.mxu0 0.0
    %1368 = vmatpush1.msra.mxu0 %v753
    %1369 = vmatprep.subr.mxu0 0.0
    %1370 = vmatpush1.msra.mxu0 %v754
    %1371 = vmatprep.subr.mxu0 0.0
    %1372 = vmatpush1.msra.mxu0 %v755
    %1373 = vmatprep.subr.mxu0 0.0
    %1374 = vmatpush1.msra.mxu0 %v756
    %1375 = vmatprep.subr.mxu0 0.0
    %1376 = vmatpush1.msra.mxu0 %v757
    %1377 = vmatprep.subr.mxu0 0.0
    %1378 = vmatpush1.msra.mxu0 0.0
    %1379 = vmatprep.subr.mxu0 0.0
    %1380 = vmatpush1.msra.mxu0 0.0
    %1381 = vmatprep.subr.mxu0 0.0
    %1382 = vmatpush1.msra.mxu0 0.0
    %1383 = vmatprep.subr.mxu0 0.0
    %1384 = vmatpush1.msra.mxu0 0.0
    %1385 = vmatprep.subr.mxu0 0.0
    %1386 = vmatpush1.msra.mxu0 0.0
    %1387 = vmatprep.subr.mxu0 0.0
    %1388 = vmatpush1.msra.mxu0 0.0
    %1389 = vmatprep.subr.mxu0 0.0
    %1390 = vmatpush1.msra.mxu0 0.0
    %1391 = vmatprep.subr.mxu0 0.0
    %1392 = vmatpush1.msra.mxu0 0.0
    %1393 = vmatprep.subr.mxu0 0.0
    %1394 = vmatpush1.msra.mxu0 0.0
    %1395 = vmatprep.subr.mxu0 0.0
    %1396 = vmatpush1.msra.mxu0 0.0
    %1397 = vmatprep.subr.mxu0 0.0
    %1398 = vmatpush1.msra.mxu0 0.0
    %1399 = vmatprep.subr.mxu0 0.0
    %1400 = vmatpush1.msra.mxu0 0.0
    %1401 = vmatprep.subr.mxu0 0.0
    %1402 = vmatpush1.msra.mxu0 0.0
    %1403 = vmatprep.subr.mxu0 0.0
    %1404 = vmatpush1.msra.mxu0 0.0
    %1405 = vmatprep.subr.mxu0 0.0
    %1406 = vmatpush1.msra.mxu0 0.0
    %1407 = vmatprep.subr.mxu0 0.0
    %1408 = vmatpush1.msra.mxu0 0.0
    %1409 = vmatprep.mubr.f32.mxu0 0.0
    %1410 = vmatmul.mubr.f32.gmra.mrb[0].mxu0 %v669
    %v1411 = vpop.f32.mrb[0].mxu0
    %v1412 = vadd.f32 %v1344, %v1411
    %v1413 = vpop.f32.mrb[0].mxu0
    %1414 = vdwg.mxu0
    %v1415 = vsub.f32 %v1412, %v669
    %v1416 = vfloor.f32 %v1412
    %v1417 = vfloor.f32 %v1415
    %vm1418 = vcmp.gt.f32.partialorder %v1416, %v1417
    %v1419 = vsel %vm1418, 1, 0
    %v1420 = vcvt.s32.f32 %v1419
    %1421 = vst [vmem:[%s3 + $0xe] sm:$0x3] %v1420
    %v1422 = vsel %vm853, %v1412, 0.0
    %v1423 = vsel %vm855, %v1422, 0.0
    %1424 = vadd.xlane.f32.xlu0 %v1423
    %v1425 = vpop.xlane.xlu0 %1424
    %1426 = vmatprep.subr.mxu0 0.0
    %1427 = vmatpush1.msra.mxu0 %v742
    %1428 = vmatprep.subr.mxu0 0.0
    %1429 = vmatpush1.msra.mxu0 %v743
    %1430 = vmatprep.subr.mxu0 0.0
    %1431 = vmatpush1.msra.mxu0 %v744
    %1432 = vmatprep.subr.mxu0 0.0
    %1433 = vmatpush1.msra.mxu0 %v745
    %1434 = vmatprep.subr.mxu0 0.0
    %1435 = vmatpush1.msra.mxu0 %v746
    %1436 = vmatprep.subr.mxu0 0.0
    %1437 = vmatpush1.msra.mxu0 %v747
    %1438 = vmatprep.subr.mxu0 0.0
    %1439 = vmatpush1.msra.mxu0 %v748
    %1440 = vmatprep.subr.mxu0 0.0
    %1441 = vmatpush1.msra.mxu0 %v749
    %1442 = vmatprep.subr.mxu0 0.0
    %1443 = vmatpush1.msra.mxu0 %v750
    %1444 = vmatprep.subr.mxu0 0.0
    %1445 = vmatpush1.msra.mxu0 %v751
    %1446 = vmatprep.subr.mxu0 0.0
    %1447 = vmatpush1.msra.mxu0 %v752
    %1448 = vmatprep.subr.mxu0 0.0
    %1449 = vmatpush1.msra.mxu0 %v753
    %1450 = vmatprep.subr.mxu0 0.0
    %1451 = vmatpush1.msra.mxu0 %v754
    %1452 = vmatprep.subr.mxu0 0.0
    %1453 = vmatpush1.msra.mxu0 %v755
    %1454 = vmatprep.subr.mxu0 0.0
    %1455 = vmatpush1.msra.mxu0 %v756
    %1456 = vmatprep.subr.mxu0 0.0
    %1457 = vmatpush1.msra.mxu0 %v757
    %1458 = vmatprep.subr.mxu0 0.0
    %1459 = vmatpush1.msra.mxu0 0.0
    %1460 = vmatprep.subr.mxu0 0.0
    %1461 = vmatpush1.msra.mxu0 0.0
    %1462 = vmatprep.subr.mxu0 0.0
    %1463 = vmatpush1.msra.mxu0 0.0
    %1464 = vmatprep.subr.mxu0 0.0
    %1465 = vmatpush1.msra.mxu0 0.0
    %1466 = vmatprep.subr.mxu0 0.0
    %1467 = vmatpush1.msra.mxu0 0.0
    %1468 = vmatprep.subr.mxu0 0.0
    %1469 = vmatpush1.msra.mxu0 0.0
    %1470 = vmatprep.subr.mxu0 0.0
    %1471 = vmatpush1.msra.mxu0 0.0
    %1472 = vmatprep.subr.mxu0 0.0
    %1473 = vmatpush1.msra.mxu0 0.0
    %1474 = vmatprep.subr.mxu0 0.0
    %1475 = vmatpush1.msra.mxu0 0.0
    %1476 = vmatprep.subr.mxu0 0.0
    %1477 = vmatpush1.msra.mxu0 0.0
    %1478 = vmatprep.subr.mxu0 0.0
    %1479 = vmatpush1.msra.mxu0 0.0
    %1480 = vmatprep.subr.mxu0 0.0
    %1481 = vmatpush1.msra.mxu0 0.0
    %1482 = vmatprep.subr.mxu0 0.0
    %1483 = vmatpush1.msra.mxu0 0.0
    %1484 = vmatprep.subr.mxu0 0.0
    %1485 = vmatpush1.msra.mxu0 0.0
    %1486 = vmatprep.subr.mxu0 0.0
    %1487 = vmatpush1.msra.mxu0 0.0
    %1488 = vmatprep.subr.mxu0 0.0
    %1489 = vmatpush1.msra.mxu0 0.0
    %1490 = vmatprep.mubr.f32.mxu0 0.0
    %1491 = vmatmul.mubr.f32.gmra.mrb[0].mxu0 %v738
    %v1492 = vpop.f32.mrb[0].mxu0
    %v1493 = vadd.f32 %v1425, %v1492
    %v1494 = vpop.f32.mrb[0].mxu0
    %1495 = vdwg.mxu0
    %v1496 = vsub.f32 %v1493, %v738
    %v1497 = vfloor.f32 %v1493
    %v1498 = vfloor.f32 %v1496
    %vm1499 = vcmp.gt.f32.partialorder %v1497, %v1498
    %v1500 = vsel %vm1499, 1, 0
    %v1501 = vcvt.s32.f32 %v1500
    %1502 = vst [vmem:[%s3 + $0x10] sm:$0x3] %v1501
    %v1503 = vsel %vm853, %v1493, 0.0
    %v1504 = vsel %vm855, %v1503, 0.0
    %1505 = vadd.xlane.f32.xlu0 %v1504
    %v1506 = vpop.xlane.xlu0 %1505
    %1507 = vmatprep.subr.mxu0 0.0
    %1508 = vmatpush1.msra.mxu0 %v742
    %1509 = vmatprep.subr.mxu0 0.0
    %1510 = vmatpush1.msra.mxu0 %v743
    %1511 = vmatprep.subr.mxu0 0.0
    %1512 = vmatpush1.msra.mxu0 %v744
    %1513 = vmatprep.subr.mxu0 0.0
    %1514 = vmatpush1.msra.mxu0 %v745
    %1515 = vmatprep.subr.mxu0 0.0
    %1516 = vmatpush1.msra.mxu0 %v746
    %1517 = vmatprep.subr.mxu0 0.0
    %1518 = vmatpush1.msra.mxu0 %v747
    %1519 = vmatprep.subr.mxu0 0.0
    %1520 = vmatpush1.msra.mxu0 %v748
    %1521 = vmatprep.subr.mxu0 0.0
    %1522 = vmatpush1.msra.mxu0 %v749
    %1523 = vmatprep.subr.mxu0 0.0
    %1524 = vmatpush1.msra.mxu0 %v750
    %1525 = vmatprep.subr.mxu0 0.0
    %1526 = vmatpush1.msra.mxu0 %v751
    %1527 = vmatprep.subr.mxu0 0.0
    %1528 = vmatpush1.msra.mxu0 %v752
    %1529 = vmatprep.subr.mxu0 0.0
    %1530 = vmatpush1.msra.mxu0 %v753
    %1531 = vmatprep.subr.mxu0 0.0
    %1532 = vmatpush1.msra.mxu0 %v754
    %1533 = vmatprep.subr.mxu0 0.0
    %1534 = vmatpush1.msra.mxu0 %v755
    %1535 = vmatprep.subr.mxu0 0.0
    %1536 = vmatpush1.msra.mxu0 %v756
    %1537 = vmatprep.subr.mxu0 0.0
    %1538 = vmatpush1.msra.mxu0 %v757
    %1539 = vmatprep.subr.mxu0 0.0
    %1540 = vmatpush1.msra.mxu0 0.0
    %1541 = vmatprep.subr.mxu0 0.0
    %1542 = vmatpush1.msra.mxu0 0.0
    %1543 = vmatprep.subr.mxu0 0.0
    %1544 = vmatpush1.msra.mxu0 0.0
    %1545 = vmatprep.subr.mxu0 0.0
    %1546 = vmatpush1.msra.mxu0 0.0
    %1547 = vmatprep.subr.mxu0 0.0
    %1548 = vmatpush1.msra.mxu0 0.0
    %1549 = vmatprep.subr.mxu0 0.0
    %1550 = vmatpush1.msra.mxu0 0.0
    %1551 = vmatprep.subr.mxu0 0.0
    %1552 = vmatpush1.msra.mxu0 0.0
    %1553 = vmatprep.subr.mxu0 0.0
    %1554 = vmatpush1.msra.mxu0 0.0
    %1555 = vmatprep.subr.mxu0 0.0
    %1556 = vmatpush1.msra.mxu0 0.0
    %1557 = vmatprep.subr.mxu0 0.0
    %1558 = vmatpush1.msra.mxu0 0.0
    %1559 = vmatprep.subr.mxu0 0.0
    %1560 = vmatpush1.msra.mxu0 0.0
    %1561 = vmatprep.subr.mxu0 0.0
    %1562 = vmatpush1.msra.mxu0 0.0
    %1563 = vmatprep.subr.mxu0 0.0
    %1564 = vmatpush1.msra.mxu0 0.0
    %1565 = vmatprep.subr.mxu0 0.0
    %1566 = vmatpush1.msra.mxu0 0.0
    %1567 = vmatprep.subr.mxu0 0.0
    %1568 = vmatpush1.msra.mxu0 0.0
    %1569 = vmatprep.subr.mxu0 0.0
    %1570 = vmatpush1.msra.mxu0 0.0
    %1571 = vmatprep.mubr.f32.mxu0 0.0
    %1572 = vmatmul.mubr.f32.gmra.mrb[0].mxu0 %v740
    %v1573 = vpop.f32.mrb[0].mxu0
    %v1574 = vadd.f32 %v1506, %v1573
    %v1575 = vpop.f32.mrb[0].mxu0
    %1576 = vdwg.mxu0
    %v1577 = vsub.f32 %v1574, %v740
    %v1578 = vfloor.f32 %v1574
    %v1579 = vfloor.f32 %v1577
    %vm1580 = vcmp.gt.f32.partialorder %v1578, %v1579
    %v1581 = vsel %vm1580, 1, 0
    %v1582 = vcvt.s32.f32 %v1581
    %1583 = vst [vmem:[%s3 + $0x12] sm:$0x3] %v1582
    %v1584 = vsel %vm853, %v1574, 0.0
    %v1585 = vsel %vm855, %v1584, 0.0
    %1586 = vadd.xlane.f32.xlu0 %v1585
    %v1587 = vpop.xlane.xlu0 %1586
    %vm1588 = vcmask 1024
    %1589 = vst.msk [vmem:[#allocation2] sm:$0x3] %vm1588, %v1587
    // Predicated region
    $region26: #{_lambda_.1} parent=1 // pred_check
      _
    $region27: #{_lambda_.1} parent=1 // pred_check_branch
      %1591 = sbr.rel (0) target = $region29
    $region28: #{_lambda_.1} parent=1 // pred_region
      _
    $region29: #{_lambda_.1} parent=1 // pred_fallthru
      _
    // Predicated region
    $region30: #{_lambda_.1} parent=1 // pred_check
      _
    $region31: #{_lambda_.1} parent=1 // pred_check_branch
      %1593 = sbr.rel (0) target = $region33
    $region32: #{_lambda_.1} parent=1 // pred_region
      _
    $region33: #{_lambda_.1} parent=1 // pred_fallthru
      _
    %1594 = vsyncpa [#allocation4], 1
    %1595 = vsyncpa [#allocation6], 1

</llo_original>
